<compile_context>
chip_gen: v6e
topology: v6e:2x2x1
jax: 0.10.0
libtpu: 0.0.40
codegen_flags: <defaults>
</compile_context>

<pallas_src>
from functools import partial

import jax
import jax.numpy as jnp
from jax import lax
from jax.experimental import pallas as pl
from jax.experimental.pallas import tpu as pltpu

TEMPERATURE = 0.05
EPS = 1e-8  # torch.cosine_similarity default eps (clamps each norm)


def _round_up(x, m):
    return ((x + m - 1) // m) * m


def _vmem_step_bytes(bt, nt, dp, in_bytes, mxu_bytes):
    """Conservative per-grid-step VMEM working set (double buffers + temps)."""
    return (2 * nt * dp * in_bytes        # negatives tile, double-buffered
            + 2 * nt * dp * 4             # in-kernel f32 temporaries over the tile
            + 2 * bt * dp * mxu_bytes     # pre-scaled text tile, double-buffered
            + 5 * nt * bt * 4             # (Nt, Bt) f32 temporaries (sim/diff/exp)
            + 16 * (bt + nt))             # spos / lse / s / m / bias (+ buffers)


def _triplet_softmax_kernel(t_ref, spos_ref, nbias_ref, n_ref, lse_ref,
                            s_ref, m_ref, *, mxu_dtype, precision,
                            track_max, mask_neg):
    k = pl.program_id(1)

    @pl.when(k == 0)
    def _init():
        # Column 0 of the similarity matrix is sim_pos/T; after subtracting it
        # from every logit it contributes exactly exp(0) = 1 to the softmax sum.
        s_ref[...] = jnp.ones_like(s_ref)
        if track_max:
            m_ref[...] = jnp.zeros_like(m_ref)

    # ---- negatives tile ----------------------------------------------------
    n_raw = n_ref[...]                                    # (Nt, D), native dtype
    n32 = n_raw.astype(jnp.float32)
    # Exact f32 row norms (VPU square + sublane-friendly reduce + EUP rsqrt).
    # Applied to the matmul OUTPUT columns, so the MXU operand is the raw tile.
    inv_n = lax.rsqrt(jnp.maximum(
        jnp.sum(n32 * n32, axis=-1, keepdims=True), EPS * EPS))       # (Nt, 1)

    # Transposed similarity tile (Nt, Bt); f32 accumulation on the MXU.
    sim = lax.dot_general(
        n_raw.astype(mxu_dtype), t_ref[...],
        dimension_numbers=(((1,), (1,)), ((), ())),
        preferred_element_type=jnp.float32,
        precision=precision)

    # diff = sim_neg/T - sim_pos/T, everything in its natural layout:
    # inv_n broadcasts along lanes, spos broadcasts along sublanes.
    diff = sim * inv_n - spos_ref[...]
    if mask_neg:  # static flag: only emitted when N was padded up
        diff = diff + nbias_ref[...]                      # -1e30 on padded rows

    if track_max:
        m_prev = m_ref[...]
        m_new = jnp.maximum(m_prev, jnp.max(diff, axis=0, keepdims=True))
        s_ref[...] = (s_ref[...] * jnp.exp(m_prev - m_new)
                      + jnp.sum(jnp.exp(diff - m_new), axis=0, keepdims=True))
        m_ref[...] = m_new
    else:
        # Unit-norm operands -> |diff| <= 2/T, safe in f32 without max shift.
        s_ref[...] = s_ref[...] + jnp.sum(jnp.exp(diff), axis=0, keepdims=True)

    @pl.when(k == pl.num_programs(1) - 1)
    def _finalize():
        if track_max:
            lse_ref[...] = m_ref[...] + jnp.log(s_ref[...])
        else:
            lse_ref[...] = jnp.log(s_ref[...])


def triplet_in_batch_neg_softmax_contrast_loss(
        text_embeddings, text_pos_embeddings, text_neg_embeddings,
        temperature=TEMPERATURE, *, b_tile=None, n_tile=None,
        use_bf16_matmul=True):
    """Forward pass of TripletInBatchNegSoftmaxContrastLoss (add_swap_loss=False).

    b_tile (if given) should be a multiple of 128 (or >= B); n_tile a multiple
    of 128.  On v7x, pick b_tile ~= round_up(B/2, 128) so nb==2 and the
    'parallel' B axis spans both TensorCores.
    """
    text, pos, neg = text_embeddings, text_pos_embeddings, text_neg_embeddings
    B, D = text.shape
    N, Dn = neg.shape
    assert pos.shape == (B, D) and Dn == D

    if use_bf16_matmul or text.dtype == jnp.bfloat16:
        mxu_dtype = jnp.bfloat16
    else:
        mxu_dtype = jnp.float32
    precision = lax.Precision.HIGHEST if mxu_dtype == jnp.float32 else None

    # ---- O(B*D) prologue in plain XLA (done once, outside the kernel) ------
    t32 = text.astype(jnp.float32)
    p32 = pos.astype(jnp.float32)
    inv_t = lax.rsqrt(jnp.maximum(jnp.sum(t32 * t32, -1, keepdims=True), EPS * EPS))
    inv_p = lax.rsqrt(jnp.maximum(jnp.sum(p32 * p32, -1, keepdims=True), EPS * EPS))
    # sim_pos / T as a (1, B) row (broadcasts over the (Nt, Bt) kernel tile).
    spos = (jnp.sum(t32 * p32, -1, keepdims=True) * inv_t * inv_p
            / temperature).reshape(1, B).astype(jnp.float32)
    # Text rows pre-normalized with 1/T folded in, stored in the MXU dtype.
    t_scaled = (t32 * (inv_t / temperature)).astype(mxu_dtype)

    # ---- tiling --------------------------------------------------------------
    d_pad = _round_up(D, 128)
    if n_tile is None:
        n_tile = min(512, _round_up(N, 128))
    n_pad = _round_up(N, n_tile)
    nk = n_pad // n_tile

    in_bytes = jnp.dtype(neg.dtype).itemsize
    mxu_bytes = jnp.dtype(mxu_dtype).itemsize

    if b_tile is None:
        # Largest B tile (=> fewest HBM re-streams of `neg`) whose per-step
        # working set stays under ~40 MiB, so it also fits v7x's 64 MiB VMEM.
        budget = 40 * 1024 * 1024
        bt = _round_up(B, 128)
        while bt > 128 and _vmem_step_bytes(bt, n_tile, d_pad,
                                            in_bytes, mxu_bytes) > budget:
            bt = _round_up(bt // 2, 128)
        b_tile = bt
    b_pad = _round_up(B, b_tile)
    nb = b_pad // b_tile

    def _pad2(x, rows, cols):
        if x.shape == (rows, cols):
            return x
        return jnp.pad(x, ((0, rows - x.shape[0]), (0, cols - x.shape[1])))

    t_p = _pad2(t_scaled, b_pad, d_pad)
    spos_p = _pad2(spos, 1, b_pad)
    neg_p = _pad2(neg, n_pad, d_pad)

    mask_neg = n_pad != N
    # Additive column bias: 0 for real negatives, -1e30 for zero-padded rows.
    nbias = jnp.where(jnp.arange(n_pad)[:, None] < N,
                      jnp.float32(0.0), jnp.float32(-1e30))

    # With unit-norm rows the logit offsets are bounded by 2/T; for the module
    # default T=0.05 that is 40, so exp never overflows f32 and the online
    # logsumexp can drop max tracking entirely.
    track_max = (2.0 / float(temperature)) > 80.0

    kernel = partial(
        _triplet_softmax_kernel,
        mxu_dtype=mxu_dtype,
        precision=precision,
        track_max=track_max,
        mask_neg=mask_neg,
    )

    step_bytes = _vmem_step_bytes(b_tile, n_tile, d_pad, in_bytes, mxu_bytes)
    # Real estimate (not clamped to a 32 MiB floor), capped below v7x's 64 MiB.
    vmem_limit = int(min(max(step_bytes * 3 // 2, 16 * 1024 * 1024),
                         62 * 1024 * 1024))

    cost = pl.CostEstimate(
        flops=int(2 * b_pad * n_pad * d_pad + 3 * nb * n_pad * d_pad),
        transcendentals=int(b_pad * n_pad + nb * n_pad),
        bytes_accessed=int(nb * n_pad * d_pad * in_bytes
                           + b_pad * d_pad * mxu_bytes
                           + 8 * b_pad + 8 * n_pad),
    )

    lse = pl.pallas_call(
        kernel,
        out_shape=jax.ShapeDtypeStruct((1, b_pad), jnp.float32),
        grid_spec=pltpu.PrefetchScalarGridSpec(
            num_scalar_prefetch=0,
            grid=(nb, nk),
            in_specs=[
                pl.BlockSpec((b_tile, d_pad), lambda b, k: (b, 0)),   # text (pre-scaled)
                pl.BlockSpec((1, b_tile),     lambda b, k: (0, b)),   # sim_pos / T
                pl.BlockSpec((n_tile, 1),     lambda b, k: (k, 0)),   # pad bias column
                pl.BlockSpec((n_tile, d_pad), lambda b, k: (k, 0)),   # negatives (raw)
            ],
            out_specs=pl.BlockSpec((1, b_tile), lambda b, k: (0, b)),
            scratch_shapes=[
                pltpu.VMEM((1, b_tile), jnp.float32),   # running softmax sum s
                pltpu.VMEM((1, b_tile), jnp.float32),   # running max m (if tracked)
            ],
        ),
        compiler_params=pltpu.CompilerParams(
            dimension_semantics=("parallel", "arbitrary"),
            vmem_limit_bytes=vmem_limit,
        ),
        cost_estimate=cost,
    )(t_p, spos_p, nbias, neg_p)

    # Tiny final reduction left to XLA so the B axis can stay 'parallel'.
    return jnp.mean(lse[0, :B])


def _reference_loss(text, pos, neg, temperature=TEMPERATURE):
    """Pure-JAX mirror of the PyTorch forward (CrossEntropy with labels==0)."""
    def cos(a, b):
        num = jnp.sum(a * b, axis=-1)
        na = jnp.maximum(jnp.linalg.norm(a, axis=-1), EPS)
        nb_ = jnp.maximum(jnp.linalg.norm(b, axis=-1), EPS)
        return num / (na * nb_)

    sim_pos = cos(text, pos)                                  # (B,)
    sim_neg = cos(text[:, None, :], neg[None, :, :])          # (B, N)
    sim = jnp.concatenate([sim_pos[:, None], sim_neg], axis=1) / temperature
    return jnp.mean(jax.scipy.special.logsumexp(sim, axis=1) - sim[:, 0])


if __name__ == "__main__":
    key = jax.random.PRNGKey(0)
    k1, k2, k3 = jax.random.split(key, 3)

    # Case 1: small shapes (batch=8, hidden=32, 8 negatives), single grid tile.
    B, N, D = 8, 8, 32
    text = jax.random.normal(k1, (B, D), dtype=jnp.float32)
    pos = jax.random.normal(k2, (B, D), dtype=jnp.float32)
    neg = jax.random.normal(k3, (N, D), dtype=jnp.float32)
    ref = _reference_loss(text, pos, neg)

    # Exact f32-MXU path.
    out = jax.block_until_ready(
        triplet_in_batch_neg_softmax_contrast_loss(text, pos, neg,
                                                   use_bf16_matmul=False))
    assert jnp.allclose(out, ref, atol=1e-3, rtol=1e-3), (out, ref)

    # Default bf16-MXU fast path (looser tolerance).
    out_bf = jax.block_until_ready(
        triplet_in_batch_neg_softmax_contrast_loss(text, pos, neg))
    assert jnp.allclose(out_bf, ref, atol=1e-1, rtol=1e-1), (out_bf, ref)

    # Case 2: exercises nb=2 along the 'parallel' B axis, nk=3 along the
    # 'arbitrary' reduction axis, online accumulation across negative tiles,
    # and masking of padded negative rows via the additive bias column.
    k4, k5, k6 = jax.random.split(jax.random.PRNGKey(1), 3)
    B2, N2, D2 = 200, 300, 144
    text2 = jax.random.normal(k4, (B2, D2), dtype=jnp.float32)
    pos2 = jax.random.normal(k5, (B2, D2), dtype=jnp.float32)
    neg2 = jax.random.normal(k6, (N2, D2), dtype=jnp.float32)
    ref2 = _reference_loss(text2, pos2, neg2)

    out2 = jax.block_until_ready(
        triplet_in_batch_neg_softmax_contrast_loss(
            text2, pos2, neg2, b_tile=128, n_tile=128, use_bf16_matmul=False))
    assert jnp.allclose(out2, ref2, atol=1e-3, rtol=1e-3), (out2, ref2)

    out2_bf = jax.block_until_ready(
        triplet_in_batch_neg_softmax_contrast_loss(
            text2, pos2, neg2, b_tile=128, n_tile=128))
    assert jnp.allclose(out2_bf, ref2, atol=1e-1, rtol=1e-1), (out2_bf, ref2)

    print("KERNEL_OK")
</pallas_src>

<mosaic_0001>
module attributes {stable_mosaic.version = 11 : i64} {
  func.func @_triplet_softmax_kernel(%arg0: i32, %arg1: i32, %arg2: memref<128x128xf32, #tpu.memory_space<vmem>>, %arg3: memref<1x128xf32, #tpu.memory_space<vmem>>, %arg4: memref<128x1xf32, #tpu.memory_space<vmem>>, %arg5: memref<128x128xf32, #tpu.memory_space<vmem>>, %arg6: memref<1x128xf32, #tpu.memory_space<vmem>>, %arg7: memref<1x128xf32, #tpu.memory_space<vmem>>, %arg8: memref<1x128xf32, #tpu.memory_space<vmem>>) attributes {dimension_semantics = [#tpu.dimension_semantics<parallel>, #tpu.dimension_semantics<arbitrary>], iteration_bounds = array<i64: 1, 1>, scalar_prefetch = 0 : i64, scratch_operands = 2 : i64, tpu.core_type = #tpu.core_type<tc>, window_params = [{transform_indices = @transform_0, window_bounds = array<i64: 128, 128>}, {transform_indices = @transform_1, window_bounds = array<i64: 1, 128>}, {transform_indices = @transform_2, window_bounds = array<i64: 128, 1>}, {transform_indices = @transform_3, window_bounds = array<i64: 128, 128>}, {transform_indices = @transform_4, window_bounds = array<i64: 1, 128>}]} {
    %c0_i32 = arith.constant 0 : i32
    %0 = arith.cmpi eq, %arg1, %c0_i32 : i32
    %1 = arith.extui %0 : i1 to i32
    %c0_i32_0 = arith.constant 0 : i32
    %2 = arith.cmpi ne, %1, %c0_i32_0 : i32
    scf.if %2 {
      %cst_17 = arith.constant 1.000000e+00 : f32
      %29 = vector.broadcast %cst_17 : f32 to vector<1x128xf32>
      %c0_18 = arith.constant 0 : index
      %c0_19 = arith.constant 0 : index
      %30 = vector.load %arg7[%c0_18, %c0_19] : memref<1x128xf32, #tpu.memory_space<vmem>>, vector<1x128xf32>
      tpu.vector_store %arg7[%c0_18, %c0_19], %29 {strides = array<i32>} : memref<1x128xf32, #tpu.memory_space<vmem>>, vector<1x128xf32>,
    } else {
    }
    %c0 = arith.constant 0 : index
    %c0_1 = arith.constant 0 : index
    %3 = vector.load %arg5[%c0, %c0_1] : memref<128x128xf32, #tpu.memory_space<vmem>>, vector<128x128xf32>
    %4 = arith.mulf %3, %3 : vector<128x128xf32>
    %cst = arith.constant dense<0.000000e+00> : vector<128xf32>
    %5 = vector.multi_reduction <add>, %4, %cst [1] : vector<128x128xf32> to vector<128xf32>
    %6 = vector.shape_cast %5 : vector<128xf32> to vector<128x1xf32>
    %cst_2 = arith.constant 1.000000e-16 : f32
    %7 = vector.broadcast %cst_2 : f32 to vector<128x1xf32>
    %8 = arith.maximumf %6, %7 : vector<128x1xf32>
    %9 = math.rsqrt %8 : vector<128x1xf32>
    %c0_3 = arith.constant 0 : index
    %c0_4 = arith.constant 0 : index
    %10 = vector.load %arg2[%c0_3, %c0_4] : memref<128x128xf32, #tpu.memory_space<vmem>>, vector<128x128xf32>
    %cst_5 = arith.constant dense<0.000000e+00> : vector<128x128xf32>
    %11 = tpu.matmul %3, %10, %cst_5 {dimension_numbers = #tpu.dot_dimension_numbers<[1], [1], [0], [0], [0, 0, 1, 0], [], []>, precision = #tpu.contract_precision<fp32>} : vector<128x128xf32>, vector<128x128xf32>, vector<128x128xf32> -> vector<128x128xf32>
    %12 = vector.broadcast %9 : vector<128x1xf32> to vector<128x128xf32>
    %13 = arith.mulf %11, %12 : vector<128x128xf32>
    %c0_6 = arith.constant 0 : index
    %c0_7 = arith.constant 0 : index
    %14 = vector.load %arg3[%c0_6, %c0_7] : memref<1x128xf32, #tpu.memory_space<vmem>>, vector<1x128xf32>
    %15 = vector.broadcast %14 : vector<1x128xf32> to vector<128x128xf32>
    %16 = arith.subf %13, %15 : vector<128x128xf32>
    %c0_8 = arith.constant 0 : index
    %c0_9 = arith.constant 0 : index
    %17 = vector.load %arg4[%c0_8, %c0_9] : memref<128x1xf32, #tpu.memory_space<vmem>>, vector<128x1xf32>
    %18 = vector.broadcast %17 : vector<128x1xf32> to vector<128x128xf32>
    %19 = arith.addf %16, %18 : vector<128x128xf32>
    %c0_10 = arith.constant 0 : index
    %c0_11 = arith.constant 0 : index
    %20 = vector.load %arg7[%c0_10, %c0_11] : memref<1x128xf32, #tpu.memory_space<vmem>>, vector<1x128xf32>
    %21 = math.exp %19 : vector<128x128xf32>
    %cst_12 = arith.constant dense<0.000000e+00> : vector<128xf32>
    %22 = vector.multi_reduction <add>, %21, %cst_12 [0] : vector<128x128xf32> to vector<128xf32>
    %23 = vector.shape_cast %22 : vector<128xf32> to vector<1x128xf32>
    %24 = arith.addf %20, %23 : vector<1x128xf32>
    %c0_13 = arith.constant 0 : index
    %c0_14 = arith.constant 0 : index
    %25 = vector.load %arg7[%c0_13, %c0_14] : memref<1x128xf32, #tpu.memory_space<vmem>>, vector<1x128xf32>
    tpu.vector_store %arg7[%c0_13, %c0_14], %24 {strides = array<i32>} : memref<1x128xf32, #tpu.memory_space<vmem>>, vector<1x128xf32>,
    %c0_i32_15 = arith.constant 0 : i32
    %26 = arith.cmpi eq, %arg1, %c0_i32_15 : i32
    %27 = arith.extui %26 : i1 to i32
    %c0_i32_16 = arith.constant 0 : i32
    %28 = arith.cmpi ne, %27, %c0_i32_16 : i32
    scf.if %28 {
      %c0_17 = arith.constant 0 : index
      %c0_18 = arith.constant 0 : index
      %29 = vector.load %arg7[%c0_17, %c0_18] : memref<1x128xf32, #tpu.memory_space<vmem>>, vector<1x128xf32>
      %30 = math.log %29 : vector<1x128xf32>
      %c0_19 = arith.constant 0 : index
      %c0_20 = arith.constant 0 : index
      %31 = vector.load %arg6[%c0_19, %c0_20] : memref<1x128xf32, #tpu.memory_space<vmem>>, vector<1x128xf32>
      tpu.vector_store %arg6[%c0_19, %c0_20], %30 {strides = array<i32>} : memref<1x128xf32, #tpu.memory_space<vmem>>, vector<1x128xf32>,
    } else {
    }
    return
  }
  func.func @transform_0(%arg0: i32, %arg1: i32) -> (i32, i32) {
    %c0_i32 = arith.constant 0 : i32
    %c0_i32_0 = arith.constant 0 : i32
    return %arg0, %c0_i32 : i32, i32
  }
  func.func @transform_1(%arg0: i32, %arg1: i32) -> (i32, i32) {
    %c0_i32 = arith.constant 0 : i32
    %c0_i32_0 = arith.constant 0 : i32
    return %c0_i32, %arg0 : i32, i32
  }
  func.func @transform_2(%arg0: i32, %arg1: i32) -> (i32, i32) {
    %c0_i32 = arith.constant 0 : i32
    %c0_i32_0 = arith.constant 0 : i32
    return %arg1, %c0_i32 : i32, i32
  }
  func.func @transform_3(%arg0: i32, %arg1: i32) -> (i32, i32) {
    %c0_i32 = arith.constant 0 : i32
    %c0_i32_0 = arith.constant 0 : i32
    return %arg1, %c0_i32 : i32, i32
  }
  func.func @transform_4(%arg0: i32, %arg1: i32) -> (i32, i32) {
    %c0_i32 = arith.constant 0 : i32
    %c0_i32_0 = arith.constant 0 : i32
    return %c0_i32, %arg0 : i32, i32
  }
}

</mosaic_0001>

<llo_original>
// kernel: tpu_custom_call.1
$region0: #{tpu_custom_call.1}
  #allocation0 [shape = 'u32[]', space=smem, size = 0x4, offset = 0x4, fixed_abs, tag = 'smem constant byte address 0x4 - core index']
  #allocation1 [shape = 'u32[144,128]{1,0:T(1,128)}', space=vmem, size = 0x12000, scoped, tag = 'internal scratch']
  #allocation2 [shape = 'f32[1,128]{1,0:T(1,128)}', space=vmem, size = 0x200, scoped, tag = 'scratch operand']
  #allocation3 [shape = 'f32[1,128]{1,0:T(1,128)}', space=vmem, size = 0x200, scoped, tag = 'scratch operand']
  %s0 = inlined_call_operand.vmem [shape: f32[128,128], index: 0, kind: input, shape index: {}]
  %s1 = inlined_call_operand.vmem [shape: f32[1,128], index: 1, kind: input, shape index: {}]
  %s2 = inlined_call_operand.vmem [shape: f32[128,1], index: 2, kind: input, shape index: {}]
  %s3 = inlined_call_operand.hbm [shape: f32[128,128], index: 3, kind: input, shape index: {}]
  %s4 = inlined_call_operand.hbm [shape: f32[1,128], index: 4, kind: output, shape index: {}]
  %s5 = sld [smem:[#allocation0]]
  $region38: #{tpu_custom_call.1} parent=0
    _
  %s7 = ssub.s32 1, %s5
  %s8 = scalar_select 0, %s7, %s5
  $region1: #{tpu_custom_call.1} parent=0
    #allocation4 [shape = 'u8[65536]{0}', space=vmem, size = 0x10000, scoped, tag = 'input window, operand 3, single buffered']
    #allocation5 [shape = 's32[1]{0}', space=sflag, size = 0x4, scoped, tag = 'scoped memory for tpu_custom_call.1']
    #allocation6 [shape = 's32[1]{0}', space=sflag, size = 0x4, scoped, tag = 'scoped memory for tpu_custom_call.1']
    #allocation7 [shape = 'u8[512]{0}', space=vmem, size = 0x400, scoped, tag = 'output window, operand 0, single buffered']
    %9 = vsyncpa [#allocation5], 0
    %10 = vsyncpa [#allocation6], 0
    // Predicated region
    $region2: #{tpu_custom_call.1} parent=1 // pred_check
      _
    $region3: #{tpu_custom_call.1} parent=1 // pred_check_branch
      %12 = sbr.rel (0) target = $region5
    $region4: #{tpu_custom_call.1} parent=1 // pred_region
      _
    $region5: #{tpu_custom_call.1} parent=1 // pred_fallthru
      _
    // Predicated region
    $region6: #{tpu_custom_call.1} parent=1 // pred_check
      _
    $region7: #{tpu_custom_call.1} parent=1 // pred_check_branch
      %14 = sbr.rel (0) target = $region9
    $region8: #{tpu_custom_call.1} parent=1 // pred_region
      _
    $region9: #{tpu_custom_call.1} parent=1 // pred_fallthru
      _
    // Predicated region
    $region10: #{tpu_custom_call.1} parent=1 // pred_check
      _
    $region11: #{tpu_custom_call.1} parent=1 // pred_check_branch
      %16 = sbr.rel (0) target = $region13
    $region12: #{tpu_custom_call.1} parent=1 // pred_region
      _
    $region13: #{tpu_custom_call.1} parent=1 // pred_fallthru
      _
    // Predicated region
    $region14: #{tpu_custom_call.1} parent=1 // pred_check
      _
    $region15: #{tpu_custom_call.1} parent=1 // pred_check_branch
      %18 = sbr.rel (0) target = $region17
    $region16: #{tpu_custom_call.1} parent=1 // pred_region
      %s20 = ssub.s32 2048, 2048
      %21 = vsyncadd [#allocation5], %s20
      %s22 = sshll.u32 [#allocation4], 4
      %s23 = int_to_ptr.vmem [resolvable:$true] %s22
      %28 = dma.hbm_to_vmem [thread:$0]  %s3, 2048, %s23, [#allocation5], 128, 128, 8
    $region17: #{tpu_custom_call.1} parent=1 // pred_fallthru
      _
    // Predicated region
    $region18: #{tpu_custom_call.1} parent=1 // pred_check
      _
    $region19: #{tpu_custom_call.1} parent=1 // pred_check_branch
      %30 = sbr.rel (0) target = $region21
    $region20: #{tpu_custom_call.1} parent=1 // pred_region
      %31 = dma.done [#allocation5], 2048
    $region21: #{tpu_custom_call.1} parent=1 // pred_fallthru
      _
    %p32 = scmp.eq.s32.totalorder 0, 0
    // Predicated region
    $region22: #{tpu_custom_call.1} parent=1 // pred_check
      %p33 = pneg %p32
    $region23: #{tpu_custom_call.1} parent=1 // pred_check_branch
      %35 = sbr.rel (%p33) target = $region25
    $region24: #{tpu_custom_call.1} parent=1 // pred_region
      %36 = vst [vmem:[#allocation2] sm:$0x1] 1.0
    $region25: #{tpu_custom_call.1} parent=1 // pred_fallthru
      _
    %v37 = vld [vmem:[#allocation4] sm:$0xff]
    %v38 = vld [vmem:[#allocation4 + $0x8] sm:$0xff]
    %v39 = vld [vmem:[#allocation4 + $0x10] sm:$0xff]
    %v40 = vld [vmem:[#allocation4 + $0x18] sm:$0xff]
    %v41 = vld [vmem:[#allocation4 + $0x20] sm:$0xff]
    %v42 = vld [vmem:[#allocation4 + $0x28] sm:$0xff]
    %v43 = vld [vmem:[#allocation4 + $0x30] sm:$0xff]
    %v44 = vld [vmem:[#allocation4 + $0x38] sm:$0xff]
    %v45 = vld [vmem:[#allocation4 + $0x40] sm:$0xff]
    %v46 = vld [vmem:[#allocation4 + $0x48] sm:$0xff]
    %v47 = vld [vmem:[#allocation4 + $0x50] sm:$0xff]
    %v48 = vld [vmem:[#allocation4 + $0x58] sm:$0xff]
    %v49 = vld [vmem:[#allocation4 + $0x60] sm:$0xff]
    %v50 = vld [vmem:[#allocation4 + $0x68] sm:$0xff]
    %v51 = vld [vmem:[#allocation4 + $0x70] sm:$0xff]
    %v52 = vld [vmem:[#allocation4 + $0x78] sm:$0xff]
    %v53 = vmul.f32 %v37, %v37
    %v54 = vmul.f32 %v38, %v38
    %v55 = vmul.f32 %v39, %v39
    %v56 = vmul.f32 %v40, %v40
    %v57 = vmul.f32 %v41, %v41
    %v58 = vmul.f32 %v42, %v42
    %v59 = vmul.f32 %v43, %v43
    %v60 = vmul.f32 %v44, %v44
    %v61 = vmul.f32 %v45, %v45
    %v62 = vmul.f32 %v46, %v46
    %v63 = vmul.f32 %v47, %v47
    %v64 = vmul.f32 %v48, %v48
    %v65 = vmul.f32 %v49, %v49
    %v66 = vmul.f32 %v50, %v50
    %v67 = vmul.f32 %v51, %v51
    %v68 = vmul.f32 %v52, %v52
    %69 = vadd.xlane.f32.xlu0 %v53
    %v70 = vpop.xlane.xlu0 %69
    %71 = vadd.xlane.f32.xlu0 %v54
    %v72 = vpop.xlane.xlu0 %71
    %73 = vadd.xlane.f32.xlu0 %v55
    %v74 = vpop.xlane.xlu0 %73
    %75 = vadd.xlane.f32.xlu0 %v56
    %v76 = vpop.xlane.xlu0 %75
    %77 = vadd.xlane.f32.xlu0 %v57
    %v78 = vpop.xlane.xlu0 %77
    %79 = vadd.xlane.f32.xlu0 %v58
    %v80 = vpop.xlane.xlu0 %79
    %81 = vadd.xlane.f32.xlu0 %v59
    %v82 = vpop.xlane.xlu0 %81
    %83 = vadd.xlane.f32.xlu0 %v60
    %v84 = vpop.xlane.xlu0 %83
    %85 = vadd.xlane.f32.xlu0 %v61
    %v86 = vpop.xlane.xlu0 %85
    %87 = vadd.xlane.f32.xlu0 %v62
    %v88 = vpop.xlane.xlu0 %87
    %89 = vadd.xlane.f32.xlu0 %v63
    %v90 = vpop.xlane.xlu0 %89
    %91 = vadd.xlane.f32.xlu0 %v64
    %v92 = vpop.xlane.xlu0 %91
    %93 = vadd.xlane.f32.xlu0 %v65
    %v94 = vpop.xlane.xlu0 %93
    %95 = vadd.xlane.f32.xlu0 %v66
    %v96 = vpop.xlane.xlu0 %95
    %97 = vadd.xlane.f32.xlu0 %v67
    %v98 = vpop.xlane.xlu0 %97
    %99 = vadd.xlane.f32.xlu0 %v68
    %v100 = vpop.xlane.xlu0 %99
    %v101 = vmax.f32 %v70, 1e-16
    %v102 = vmax.f32 %v72, 1e-16
    %v103 = vmax.f32 %v74, 1e-16
    %v104 = vmax.f32 %v76, 1e-16
    %v105 = vmax.f32 %v78, 1e-16
    %v106 = vmax.f32 %v80, 1e-16
    %v107 = vmax.f32 %v82, 1e-16
    %v108 = vmax.f32 %v84, 1e-16
    %v109 = vmax.f32 %v86, 1e-16
    %v110 = vmax.f32 %v88, 1e-16
    %v111 = vmax.f32 %v90, 1e-16
    %v112 = vmax.f32 %v92, 1e-16
    %v113 = vmax.f32 %v94, 1e-16
    %v114 = vmax.f32 %v96, 1e-16
    %v115 = vmax.f32 %v98, 1e-16
    %v116 = vmax.f32 %v100, 1e-16
    %v117 = vrsqrt.pop %v101
    %v118 = vrsqrt.pop %v102
    %v119 = vrsqrt.pop %v103
    %v120 = vrsqrt.pop %v104
    %v121 = vrsqrt.pop %v105
    %v122 = vrsqrt.pop %v106
    %v123 = vrsqrt.pop %v107
    %v124 = vrsqrt.pop %v108
    %v125 = vrsqrt.pop %v109
    %v126 = vrsqrt.pop %v110
    %v127 = vrsqrt.pop %v111
    %v128 = vrsqrt.pop %v112
    %v129 = vrsqrt.pop %v113
    %v130 = vrsqrt.pop %v114
    %v131 = vrsqrt.pop %v115
    %v132 = vrsqrt.pop %v116
    %v133 = vld [vmem:[%s0] sm:$0xff]
    %v134 = vld [vmem:[%s0 + $0x8] sm:$0xff]
    %v135 = vld [vmem:[%s0 + $0x10] sm:$0xff]
    %v136 = vld [vmem:[%s0 + $0x18] sm:$0xff]
    %v137 = vld [vmem:[%s0 + $0x20] sm:$0xff]
    %v138 = vld [vmem:[%s0 + $0x28] sm:$0xff]
    %v139 = vld [vmem:[%s0 + $0x30] sm:$0xff]
    %v140 = vld [vmem:[%s0 + $0x38] sm:$0xff]
    %v141 = vld [vmem:[%s0 + $0x40] sm:$0xff]
    %v142 = vld [vmem:[%s0 + $0x48] sm:$0xff]
    %v143 = vld [vmem:[%s0 + $0x50] sm:$0xff]
    %v144 = vld [vmem:[%s0 + $0x58] sm:$0xff]
    %v145 = vld [vmem:[%s0 + $0x60] sm:$0xff]
    %v146 = vld [vmem:[%s0 + $0x68] sm:$0xff]
    %v147 = vld [vmem:[%s0 + $0x70] sm:$0xff]
    %v148 = vld [vmem:[%s0 + $0x78] sm:$0xff]
    %149 = vmatprep.subr.mxu0 0.0
    %v150 = vand.u32 %v148, 4294901760
    %151 = vmatpush1.xpose.msra.mxu0 %v150
    %152 = vmatprep.subr.mxu0 0.0
    %v153 = vand.u32 %v147, 4294901760
    %154 = vmatpush1.xpose.msra.mxu0 %v153
    %155 = vmatprep.subr.mxu0 0.0
    %v156 = vand.u32 %v146, 4294901760
    %157 = vmatpush1.xpose.msra.mxu0 %v156
    %158 = vmatprep.subr.mxu0 0.0
    %v159 = vand.u32 %v145, 4294901760
    %160 = vmatpush1.xpose.msra.mxu0 %v159
    %161 = vmatprep.subr.mxu0 0.0
    %v162 = vand.u32 %v144, 4294901760
    %163 = vmatpush1.xpose.msra.mxu0 %v162
    %164 = vmatprep.subr.mxu0 0.0
    %v165 = vand.u32 %v143, 4294901760
    %166 = vmatpush1.xpose.msra.mxu0 %v165
    %167 = vmatprep.subr.mxu0 0.0
    %v168 = vand.u32 %v142, 4294901760
    %169 = vmatpush1.xpose.msra.mxu0 %v168
    %170 = vmatprep.subr.mxu0 0.0
    %v171 = vand.u32 %v141, 4294901760
    %172 = vmatpush1.xpose.msra.mxu0 %v171
    %173 = vmatprep.subr.mxu0 0.0
    %v174 = vand.u32 %v140, 4294901760
    %175 = vmatpush1.xpose.msra.mxu0 %v174
    %176 = vmatprep.subr.mxu0 0.0
    %v177 = vand.u32 %v139, 4294901760
    %178 = vmatpush1.xpose.msra.mxu0 %v177
    %179 = vmatprep.subr.mxu0 0.0
    %v180 = vand.u32 %v138, 4294901760
    %181 = vmatpush1.xpose.msra.mxu0 %v180
    %182 = vmatprep.subr.mxu0 0.0
    %v183 = vand.u32 %v137, 4294901760
    %184 = vmatpush1.xpose.msra.mxu0 %v183
    %185 = vmatprep.subr.mxu0 0.0
    %v186 = vand.u32 %v136, 4294901760
    %187 = vmatpush1.xpose.msra.mxu0 %v186
    %188 = vmatprep.subr.mxu0 0.0
    %v189 = vand.u32 %v135, 4294901760
    %190 = vmatpush1.xpose.msra.mxu0 %v189
    %191 = vmatprep.subr.mxu0 0.0
    %v192 = vand.u32 %v134, 4294901760
    %193 = vmatpush1.xpose.msra.mxu0 %v192
    %194 = vmatprep.subr.mxu0 0.0
    %v195 = vand.u32 %v133, 4294901760
    %196 = vmatpush1.xpose.msra.mxu0 %v195
    %197 = vmatprep.subr.mxu0 0.0
    %198 = vmatpush2.xpose.msra.mxu0 0.0
    %199 = vmatprep.subr.mxu0 0.0
    %200 = vmatpush2.xpose.msra.mxu0 0.0
    %201 = vmatprep.subr.mxu0 0.0
    %202 = vmatpush2.xpose.msra.mxu0 0.0
    %203 = vmatprep.subr.mxu0 0.0
    %204 = vmatpush2.xpose.msra.mxu0 0.0
    %205 = vmatprep.subr.mxu0 0.0
    %206 = vmatpush2.xpose.msra.mxu0 0.0
    %207 = vmatprep.subr.mxu0 0.0
    %208 = vmatpush2.xpose.msra.mxu0 0.0
    %209 = vmatprep.subr.mxu0 0.0
    %210 = vmatpush2.xpose.msra.mxu0 0.0
    %211 = vmatprep.subr.mxu0 0.0
    %212 = vmatpush2.xpose.msra.mxu0 0.0
    %213 = vmatprep.subr.mxu0 0.0
    %214 = vmatpush2.xpose.msra.mxu0 0.0
    %215 = vmatprep.subr.mxu0 0.0
    %216 = vmatpush2.xpose.msra.mxu0 0.0
    %217 = vmatprep.subr.mxu0 0.0
    %218 = vmatpush2.xpose.msra.mxu0 0.0
    %219 = vmatprep.subr.mxu0 0.0
    %220 = vmatpush2.xpose.msra.mxu0 0.0
    %221 = vmatprep.subr.mxu0 0.0
    %222 = vmatpush2.xpose.msra.mxu0 0.0
    %223 = vmatprep.subr.mxu0 0.0
    %224 = vmatpush2.xpose.msra.mxu0 0.0
    %225 = vmatprep.subr.mxu0 0.0
    %226 = vmatpush2.xpose.msra.mxu0 0.0
    %227 = vmatprep.subr.mxu0 0.0
    %228 = vmatpush2.xpose.msra.mxu0 0.0
    %229 = vmatprep.mubr.f32.mxu0 0.0
    %v230 = vand.u32 %v37, 4294901760
    %v231 = vsub.f32 %v37, %v230
    %v232 = vand.u32 %v231, 4294901760
    %v233 = vsub.f32 %v231, %v232
    %v234 = vand.u32 %v233, 4294901760
    %235 = vmatmul.mubr.f32.gmra.mxu0 %v234
    %v236 = vpop.f32.mrf.mxu0
    %v237 = vadd.f32 0.0, %v236
    %v238 = vpop.f32.mrf.mxu0
    %239 = vmatprep.mubr.f32.mxu0 0.0
    %v240 = vand.u32 %v38, 4294901760
    %v241 = vsub.f32 %v38, %v240
    %v242 = vand.u32 %v241, 4294901760
    %v243 = vsub.f32 %v241, %v242
    %v244 = vand.u32 %v243, 4294901760
    %245 = vmatmul.mubr.f32.gmra.mxu0 %v244
    %v246 = vpop.f32.mrf.mxu0
    %v247 = vadd.f32 0.0, %v246
    %v248 = vpop.f32.mrf.mxu0
    %249 = vmatprep.mubr.f32.mxu0 0.0
    %v250 = vand.u32 %v39, 4294901760
    %v251 = vsub.f32 %v39, %v250
    %v252 = vand.u32 %v251, 4294901760
    %v253 = vsub.f32 %v251, %v252
    %v254 = vand.u32 %v253, 4294901760
    %255 = vmatmul.mubr.f32.gmra.mxu0 %v254
    %v256 = vpop.f32.mrf.mxu0
    %v257 = vadd.f32 0.0, %v256
    %v258 = vpop.f32.mrf.mxu0
    %259 = vmatprep.mubr.f32.mxu0 0.0
    %v260 = vand.u32 %v40, 4294901760
    %v261 = vsub.f32 %v40, %v260
    %v262 = vand.u32 %v261, 4294901760
    %v263 = vsub.f32 %v261, %v262
    %v264 = vand.u32 %v263, 4294901760
    %265 = vmatmul.mubr.f32.gmra.mxu0 %v264
    %v266 = vpop.f32.mrf.mxu0
    %v267 = vadd.f32 0.0, %v266
    %v268 = vpop.f32.mrf.mxu0
    %269 = vmatprep.mubr.f32.mxu0 0.0
    %v270 = vand.u32 %v41, 4294901760
    %v271 = vsub.f32 %v41, %v270
    %v272 = vand.u32 %v271, 4294901760
    %v273 = vsub.f32 %v271, %v272
    %v274 = vand.u32 %v273, 4294901760
    %275 = vmatmul.mubr.f32.gmra.mxu0 %v274
    %v276 = vpop.f32.mrf.mxu0
    %v277 = vadd.f32 0.0, %v276
    %v278 = vpop.f32.mrf.mxu0
    %279 = vmatprep.mubr.f32.mxu0 0.0
    %v280 = vand.u32 %v42, 4294901760
    %v281 = vsub.f32 %v42, %v280
    %v282 = vand.u32 %v281, 4294901760
    %v283 = vsub.f32 %v281, %v282
    %v284 = vand.u32 %v283, 4294901760
    %285 = vmatmul.mubr.f32.gmra.mxu0 %v284
    %v286 = vpop.f32.mrf.mxu0
    %v287 = vadd.f32 0.0, %v286
    %v288 = vpop.f32.mrf.mxu0
    %289 = vmatprep.mubr.f32.mxu0 0.0
    %v290 = vand.u32 %v43, 4294901760
    %v291 = vsub.f32 %v43, %v290
    %v292 = vand.u32 %v291, 4294901760
    %v293 = vsub.f32 %v291, %v292
    %v294 = vand.u32 %v293, 4294901760
    %295 = vmatmul.mubr.f32.gmra.mxu0 %v294
    %v296 = vpop.f32.mrf.mxu0
    %v297 = vadd.f32 0.0, %v296
    %v298 = vpop.f32.mrf.mxu0
    %299 = vmatprep.mubr.f32.mxu0 0.0
    %v300 = vand.u32 %v44, 4294901760
    %v301 = vsub.f32 %v44, %v300
    %v302 = vand.u32 %v301, 4294901760
    %v303 = vsub.f32 %v301, %v302
    %v304 = vand.u32 %v303, 4294901760
    %305 = vmatmul.mubr.f32.gmra.mxu0 %v304
    %v306 = vpop.f32.mrf.mxu0
    %v307 = vadd.f32 0.0, %v306
    %v308 = vpop.f32.mrf.mxu0
    %309 = vmatprep.mubr.f32.mxu0 0.0
    %v310 = vand.u32 %v45, 4294901760
    %v311 = vsub.f32 %v45, %v310
    %v312 = vand.u32 %v311, 4294901760
    %v313 = vsub.f32 %v311, %v312
    %v314 = vand.u32 %v313, 4294901760
    %315 = vmatmul.mubr.f32.gmra.mxu0 %v314
    %v316 = vpop.f32.mrf.mxu0
    %v317 = vadd.f32 0.0, %v316
    %v318 = vpop.f32.mrf.mxu0
    %319 = vmatprep.mubr.f32.mxu0 0.0
    %v320 = vand.u32 %v46, 4294901760
    %v321 = vsub.f32 %v46, %v320
    %v322 = vand.u32 %v321, 4294901760
    %v323 = vsub.f32 %v321, %v322
    %v324 = vand.u32 %v323, 4294901760
    %325 = vmatmul.mubr.f32.gmra.mxu0 %v324
    %v326 = vpop.f32.mrf.mxu0
    %v327 = vadd.f32 0.0, %v326
    %v328 = vpop.f32.mrf.mxu0
    %329 = vmatprep.mubr.f32.mxu0 0.0
    %v330 = vand.u32 %v47, 4294901760
    %v331 = vsub.f32 %v47, %v330
    %v332 = vand.u32 %v331, 4294901760
    %v333 = vsub.f32 %v331, %v332
    %v334 = vand.u32 %v333, 4294901760
    %335 = vmatmul.mubr.f32.gmra.mxu0 %v334
    %v336 = vpop.f32.mrf.mxu0
    %v337 = vadd.f32 0.0, %v336
    %v338 = vpop.f32.mrf.mxu0
    %339 = vmatprep.mubr.f32.mxu0 0.0
    %v340 = vand.u32 %v48, 4294901760
    %v341 = vsub.f32 %v48, %v340
    %v342 = vand.u32 %v341, 4294901760
    %v343 = vsub.f32 %v341, %v342
    %v344 = vand.u32 %v343, 4294901760
    %345 = vmatmul.mubr.f32.gmra.mxu0 %v344
    %v346 = vpop.f32.mrf.mxu0
    %v347 = vadd.f32 0.0, %v346
    %v348 = vpop.f32.mrf.mxu0
    %349 = vmatprep.mubr.f32.mxu0 0.0
    %v350 = vand.u32 %v49, 4294901760
    %v351 = vsub.f32 %v49, %v350
    %v352 = vand.u32 %v351, 4294901760
    %v353 = vsub.f32 %v351, %v352
    %v354 = vand.u32 %v353, 4294901760
    %355 = vmatmul.mubr.f32.gmra.mxu0 %v354
    %v356 = vpop.f32.mrf.mxu0
    %v357 = vadd.f32 0.0, %v356
    %v358 = vpop.f32.mrf.mxu0
    %359 = vmatprep.mubr.f32.mxu0 0.0
    %v360 = vand.u32 %v50, 4294901760
    %v361 = vsub.f32 %v50, %v360
    %v362 = vand.u32 %v361, 4294901760
    %v363 = vsub.f32 %v361, %v362
    %v364 = vand.u32 %v363, 4294901760
    %365 = vmatmul.mubr.f32.gmra.mxu0 %v364
    %v366 = vpop.f32.mrf.mxu0
    %v367 = vadd.f32 0.0, %v366
    %v368 = vpop.f32.mrf.mxu0
    %369 = vmatprep.mubr.f32.mxu0 0.0
    %v370 = vand.u32 %v51, 4294901760
    %v371 = vsub.f32 %v51, %v370
    %v372 = vand.u32 %v371, 4294901760
    %v373 = vsub.f32 %v371, %v372
    %v374 = vand.u32 %v373, 4294901760
    %375 = vmatmul.mubr.f32.gmra.mxu0 %v374
    %v376 = vpop.f32.mrf.mxu0
    %v377 = vadd.f32 0.0, %v376
    %v378 = vpop.f32.mrf.mxu0
    %379 = vmatprep.mubr.f32.mxu0 0.0
    %v380 = vand.u32 %v52, 4294901760
    %v381 = vsub.f32 %v52, %v380
    %v382 = vand.u32 %v381, 4294901760
    %v383 = vsub.f32 %v381, %v382
    %v384 = vand.u32 %v383, 4294901760
    %385 = vmatmul.mubr.f32.gmra.mxu0 %v384
    %v386 = vpop.f32.mrf.mxu0
    %v387 = vadd.f32 0.0, %v386
    %v388 = vpop.f32.mrf.mxu0
    %389 = vdwg.mxu0
    %390 = vmatprep.subr.mxu0 0.0
    %v391 = vand.u32 %v148, 4294901760
    %v392 = vsub.f32 %v148, %v391
    %v393 = vand.u32 %v392, 4294901760
    %v394 = vsub.f32 %v392, %v393
    %v395 = vand.u32 %v394, 4294901760
    %396 = vmatpush1.xpose.msra.mxu0 %v395
    %397 = vmatprep.subr.mxu0 0.0
    %v398 = vand.u32 %v147, 4294901760
    %v399 = vsub.f32 %v147, %v398
    %v400 = vand.u32 %v399, 4294901760
    %v401 = vsub.f32 %v399, %v400
    %v402 = vand.u32 %v401, 4294901760
    %403 = vmatpush1.xpose.msra.mxu0 %v402
    %404 = vmatprep.subr.mxu0 0.0
    %v405 = vand.u32 %v146, 4294901760
    %v406 = vsub.f32 %v146, %v405
    %v407 = vand.u32 %v406, 4294901760
    %v408 = vsub.f32 %v406, %v407
    %v409 = vand.u32 %v408, 4294901760
    %410 = vmatpush1.xpose.msra.mxu0 %v409
    %411 = vmatprep.subr.mxu0 0.0
    %v412 = vand.u32 %v145, 4294901760
    %v413 = vsub.f32 %v145, %v412
    %v414 = vand.u32 %v413, 4294901760
    %v415 = vsub.f32 %v413, %v414
    %v416 = vand.u32 %v415, 4294901760
    %417 = vmatpush1.xpose.msra.mxu0 %v416
    %418 = vmatprep.subr.mxu0 0.0
    %v419 = vand.u32 %v144, 4294901760
    %v420 = vsub.f32 %v144, %v419
    %v421 = vand.u32 %v420, 4294901760
    %v422 = vsub.f32 %v420, %v421
    %v423 = vand.u32 %v422, 4294901760
    %424 = vmatpush1.xpose.msra.mxu0 %v423
    %425 = vmatprep.subr.mxu0 0.0
    %v426 = vand.u32 %v143, 4294901760
    %v427 = vsub.f32 %v143, %v426
    %v428 = vand.u32 %v427, 4294901760
    %v429 = vsub.f32 %v427, %v428
    %v430 = vand.u32 %v429, 4294901760
    %431 = vmatpush1.xpose.msra.mxu0 %v430
    %432 = vmatprep.subr.mxu0 0.0
    %v433 = vand.u32 %v142, 4294901760
    %v434 = vsub.f32 %v142, %v433
    %v435 = vand.u32 %v434, 4294901760
    %v436 = vsub.f32 %v434, %v435
    %v437 = vand.u32 %v436, 4294901760
    %438 = vmatpush1.xpose.msra.mxu0 %v437
    %439 = vmatprep.subr.mxu0 0.0
    %v440 = vand.u32 %v141, 4294901760
    %v441 = vsub.f32 %v141, %v440
    %v442 = vand.u32 %v441, 4294901760
    %v443 = vsub.f32 %v441, %v442
    %v444 = vand.u32 %v443, 4294901760
    %445 = vmatpush1.xpose.msra.mxu0 %v444
    %446 = vmatprep.subr.mxu0 0.0
    %v447 = vand.u32 %v140, 4294901760
    %v448 = vsub.f32 %v140, %v447
    %v449 = vand.u32 %v448, 4294901760
    %v450 = vsub.f32 %v448, %v449
    %v451 = vand.u32 %v450, 4294901760
    %452 = vmatpush1.xpose.msra.mxu0 %v451
    %453 = vmatprep.subr.mxu0 0.0
    %v454 = vand.u32 %v139, 4294901760
    %v455 = vsub.f32 %v139, %v454
    %v456 = vand.u32 %v455, 4294901760
    %v457 = vsub.f32 %v455, %v456
    %v458 = vand.u32 %v457, 4294901760
    %459 = vmatpush1.xpose.msra.mxu0 %v458
    %460 = vmatprep.subr.mxu0 0.0
    %v461 = vand.u32 %v138, 4294901760
    %v462 = vsub.f32 %v138, %v461
    %v463 = vand.u32 %v462, 4294901760
    %v464 = vsub.f32 %v462, %v463
    %v465 = vand.u32 %v464, 4294901760
    %466 = vmatpush1.xpose.msra.mxu0 %v465
    %467 = vmatprep.subr.mxu0 0.0
    %v468 = vand.u32 %v137, 4294901760
    %v469 = vsub.f32 %v137, %v468
    %v470 = vand.u32 %v469, 4294901760
    %v471 = vsub.f32 %v469, %v470
    %v472 = vand.u32 %v471, 4294901760
    %473 = vmatpush1.xpose.msra.mxu0 %v472
    %474 = vmatprep.subr.mxu0 0.0
    %v475 = vand.u32 %v136, 4294901760
    %v476 = vsub.f32 %v136, %v475
    %v477 = vand.u32 %v476, 4294901760
    %v478 = vsub.f32 %v476, %v477
    %v479 = vand.u32 %v478, 4294901760
    %480 = vmatpush1.xpose.msra.mxu0 %v479
    %481 = vmatprep.subr.mxu0 0.0
    %v482 = vand.u32 %v135, 4294901760
    %v483 = vsub.f32 %v135, %v482
    %v484 = vand.u32 %v483, 4294901760
    %v485 = vsub.f32 %v483, %v484
    %v486 = vand.u32 %v485, 4294901760
    %487 = vmatpush1.xpose.msra.mxu0 %v486
    %488 = vmatprep.subr.mxu0 0.0
    %v489 = vand.u32 %v134, 4294901760
    %v490 = vsub.f32 %v134, %v489
    %v491 = vand.u32 %v490, 4294901760
    %v492 = vsub.f32 %v490, %v491
    %v493 = vand.u32 %v492, 4294901760
    %494 = vmatpush1.xpose.msra.mxu0 %v493
    %495 = vmatprep.subr.mxu0 0.0
    %v496 = vand.u32 %v133, 4294901760
    %v497 = vsub.f32 %v133, %v496
    %v498 = vand.u32 %v497, 4294901760
    %v499 = vsub.f32 %v497, %v498
    %v500 = vand.u32 %v499, 4294901760
    %501 = vmatpush1.xpose.msra.mxu0 %v500
    %502 = vmatprep.subr.mxu0 0.0
    %503 = vmatpush2.xpose.msra.mxu0 0.0
    %504 = vmatprep.subr.mxu0 0.0
    %505 = vmatpush2.xpose.msra.mxu0 0.0
    %506 = vmatprep.subr.mxu0 0.0
    %507 = vmatpush2.xpose.msra.mxu0 0.0
    %508 = vmatprep.subr.mxu0 0.0
    %509 = vmatpush2.xpose.msra.mxu0 0.0
    %510 = vmatprep.subr.mxu0 0.0
    %511 = vmatpush2.xpose.msra.mxu0 0.0
    %512 = vmatprep.subr.mxu0 0.0
    %513 = vmatpush2.xpose.msra.mxu0 0.0
    %514 = vmatprep.subr.mxu0 0.0
    %515 = vmatpush2.xpose.msra.mxu0 0.0
    %516 = vmatprep.subr.mxu0 0.0
    %517 = vmatpush2.xpose.msra.mxu0 0.0
    %518 = vmatprep.subr.mxu0 0.0
    %519 = vmatpush2.xpose.msra.mxu0 0.0
    %520 = vmatprep.subr.mxu0 0.0
    %521 = vmatpush2.xpose.msra.mxu0 0.0
    %522 = vmatprep.subr.mxu0 0.0
    %523 = vmatpush2.xpose.msra.mxu0 0.0
    %524 = vmatprep.subr.mxu0 0.0
    %525 = vmatpush2.xpose.msra.mxu0 0.0
    %526 = vmatprep.subr.mxu0 0.0
    %527 = vmatpush2.xpose.msra.mxu0 0.0
    %528 = vmatprep.subr.mxu0 0.0
    %529 = vmatpush2.xpose.msra.mxu0 0.0
    %530 = vmatprep.subr.mxu0 0.0
    %531 = vmatpush2.xpose.msra.mxu0 0.0
    %532 = vmatprep.subr.mxu0 0.0
    %533 = vmatpush2.xpose.msra.mxu0 0.0
    %534 = vmatprep.mubr.f32.mxu0 0.0
    %v535 = vand.u32 %v37, 4294901760
    %536 = vmatmul.mubr.f32.gmra.mxu0 %v535
    %v537 = vpop.f32.mrf.mxu0
    %v538 = vadd.f32 %v237, %v537
    %v539 = vpop.f32.mrf.mxu0
    %540 = vmatprep.mubr.f32.mxu0 0.0
    %v541 = vand.u32 %v38, 4294901760
    %542 = vmatmul.mubr.f32.gmra.mxu0 %v541
    %v543 = vpop.f32.mrf.mxu0
    %v544 = vadd.f32 %v247, %v543
    %v545 = vpop.f32.mrf.mxu0
    %546 = vmatprep.mubr.f32.mxu0 0.0
    %v547 = vand.u32 %v39, 4294901760
    %548 = vmatmul.mubr.f32.gmra.mxu0 %v547
    %v549 = vpop.f32.mrf.mxu0
    %v550 = vadd.f32 %v257, %v549
    %v551 = vpop.f32.mrf.mxu0
    %552 = vmatprep.mubr.f32.mxu0 0.0
    %v553 = vand.u32 %v40, 4294901760
    %554 = vmatmul.mubr.f32.gmra.mxu0 %v553
    %v555 = vpop.f32.mrf.mxu0
    %v556 = vadd.f32 %v267, %v555
    %v557 = vpop.f32.mrf.mxu0
    %558 = vmatprep.mubr.f32.mxu0 0.0
    %v559 = vand.u32 %v41, 4294901760
    %560 = vmatmul.mubr.f32.gmra.mxu0 %v559
    %v561 = vpop.f32.mrf.mxu0
    %v562 = vadd.f32 %v277, %v561
    %v563 = vpop.f32.mrf.mxu0
    %564 = vmatprep.mubr.f32.mxu0 0.0
    %v565 = vand.u32 %v42, 4294901760
    %566 = vmatmul.mubr.f32.gmra.mxu0 %v565
    %v567 = vpop.f32.mrf.mxu0
    %v568 = vadd.f32 %v287, %v567
    %v569 = vpop.f32.mrf.mxu0
    %570 = vmatprep.mubr.f32.mxu0 0.0
    %v571 = vand.u32 %v43, 4294901760
    %572 = vmatmul.mubr.f32.gmra.mxu0 %v571
    %v573 = vpop.f32.mrf.mxu0
    %v574 = vadd.f32 %v297, %v573
    %v575 = vpop.f32.mrf.mxu0
    %576 = vmatprep.mubr.f32.mxu0 0.0
    %v577 = vand.u32 %v44, 4294901760
    %578 = vmatmul.mubr.f32.gmra.mxu0 %v577
    %v579 = vpop.f32.mrf.mxu0
    %v580 = vadd.f32 %v307, %v579
    %v581 = vpop.f32.mrf.mxu0
    %582 = vmatprep.mubr.f32.mxu0 0.0
    %v583 = vand.u32 %v45, 4294901760
    %584 = vmatmul.mubr.f32.gmra.mxu0 %v583
    %v585 = vpop.f32.mrf.mxu0
    %v586 = vadd.f32 %v317, %v585
    %v587 = vpop.f32.mrf.mxu0
    %588 = vmatprep.mubr.f32.mxu0 0.0
    %v589 = vand.u32 %v46, 4294901760
    %590 = vmatmul.mubr.f32.gmra.mxu0 %v589
    %v591 = vpop.f32.mrf.mxu0
    %v592 = vadd.f32 %v327, %v591
    %v593 = vpop.f32.mrf.mxu0
    %594 = vmatprep.mubr.f32.mxu0 0.0
    %v595 = vand.u32 %v47, 4294901760
    %596 = vmatmul.mubr.f32.gmra.mxu0 %v595
    %v597 = vpop.f32.mrf.mxu0
    %v598 = vadd.f32 %v337, %v597
    %v599 = vpop.f32.mrf.mxu0
    %600 = vmatprep.mubr.f32.mxu0 0.0
    %v601 = vand.u32 %v48, 4294901760
    %602 = vmatmul.mubr.f32.gmra.mxu0 %v601
    %v603 = vpop.f32.mrf.mxu0
    %v604 = vadd.f32 %v347, %v603
    %v605 = vpop.f32.mrf.mxu0
    %606 = vmatprep.mubr.f32.mxu0 0.0
    %v607 = vand.u32 %v49, 4294901760
    %608 = vmatmul.mubr.f32.gmra.mxu0 %v607
    %v609 = vpop.f32.mrf.mxu0
    %v610 = vadd.f32 %v357, %v609
    %v611 = vpop.f32.mrf.mxu0
    %612 = vmatprep.mubr.f32.mxu0 0.0
    %v613 = vand.u32 %v50, 4294901760
    %614 = vmatmul.mubr.f32.gmra.mxu0 %v613
    %v615 = vpop.f32.mrf.mxu0
    %v616 = vadd.f32 %v367, %v615
    %v617 = vpop.f32.mrf.mxu0
    %618 = vmatprep.mubr.f32.mxu0 0.0
    %v619 = vand.u32 %v51, 4294901760
    %620 = vmatmul.mubr.f32.gmra.mxu0 %v619
    %v621 = vpop.f32.mrf.mxu0
    %v622 = vadd.f32 %v377, %v621
    %v623 = vpop.f32.mrf.mxu0
    %624 = vmatprep.mubr.f32.mxu0 0.0
    %v625 = vand.u32 %v52, 4294901760
    %626 = vmatmul.mubr.f32.gmra.mxu0 %v625
    %v627 = vpop.f32.mrf.mxu0
    %v628 = vadd.f32 %v387, %v627
    %v629 = vpop.f32.mrf.mxu0
    %630 = vdwg.mxu0
    %631 = vmatprep.subr.mxu0 0.0
    %v632 = vand.u32 %v148, 4294901760
    %v633 = vsub.f32 %v148, %v632
    %634 = vmatpush1.xpose.msra.mxu0 %v633
    %635 = vmatprep.subr.mxu0 0.0
    %v636 = vand.u32 %v147, 4294901760
    %v637 = vsub.f32 %v147, %v636
    %638 = vmatpush1.xpose.msra.mxu0 %v637
    %639 = vmatprep.subr.mxu0 0.0
    %v640 = vand.u32 %v146, 4294901760
    %v641 = vsub.f32 %v146, %v640
    %642 = vmatpush1.xpose.msra.mxu0 %v641
    %643 = vmatprep.subr.mxu0 0.0
    %v644 = vand.u32 %v145, 4294901760
    %v645 = vsub.f32 %v145, %v644
    %646 = vmatpush1.xpose.msra.mxu0 %v645
    %647 = vmatprep.subr.mxu0 0.0
    %v648 = vand.u32 %v144, 4294901760
    %v649 = vsub.f32 %v144, %v648
    %650 = vmatpush1.xpose.msra.mxu0 %v649
    %651 = vmatprep.subr.mxu0 0.0
    %v652 = vand.u32 %v143, 4294901760
    %v653 = vsub.f32 %v143, %v652
    %654 = vmatpush1.xpose.msra.mxu0 %v653
    %655 = vmatprep.subr.mxu0 0.0
    %v656 = vand.u32 %v142, 4294901760
    %v657 = vsub.f32 %v142, %v656
    %658 = vmatpush1.xpose.msra.mxu0 %v657
    %659 = vmatprep.subr.mxu0 0.0
    %v660 = vand.u32 %v141, 4294901760
    %v661 = vsub.f32 %v141, %v660
    %662 = vmatpush1.xpose.msra.mxu0 %v661
    %663 = vmatprep.subr.mxu0 0.0
    %v664 = vand.u32 %v140, 4294901760
    %v665 = vsub.f32 %v140, %v664
    %666 = vmatpush1.xpose.msra.mxu0 %v665
    %667 = vmatprep.subr.mxu0 0.0
    %v668 = vand.u32 %v139, 4294901760
    %v669 = vsub.f32 %v139, %v668
    %670 = vmatpush1.xpose.msra.mxu0 %v669
    %671 = vmatprep.subr.mxu0 0.0
    %v672 = vand.u32 %v138, 4294901760
    %v673 = vsub.f32 %v138, %v672
    %674 = vmatpush1.xpose.msra.mxu0 %v673
    %675 = vmatprep.subr.mxu0 0.0
    %v676 = vand.u32 %v137, 4294901760
    %v677 = vsub.f32 %v137, %v676
    %678 = vmatpush1.xpose.msra.mxu0 %v677
    %679 = vmatprep.subr.mxu0 0.0
    %v680 = vand.u32 %v136, 4294901760
    %v681 = vsub.f32 %v136, %v680
    %682 = vmatpush1.xpose.msra.mxu0 %v681
    %683 = vmatprep.subr.mxu0 0.0
    %v684 = vand.u32 %v135, 4294901760
    %v685 = vsub.f32 %v135, %v684
    %686 = vmatpush1.xpose.msra.mxu0 %v685
    %687 = vmatprep.subr.mxu0 0.0
    %v688 = vand.u32 %v134, 4294901760
    %v689 = vsub.f32 %v134, %v688
    %690 = vmatpush1.xpose.msra.mxu0 %v689
    %691 = vmatprep.subr.mxu0 0.0
    %v692 = vand.u32 %v133, 4294901760
    %v693 = vsub.f32 %v133, %v692
    %694 = vmatpush1.xpose.msra.mxu0 %v693
    %695 = vmatprep.subr.mxu0 0.0
    %696 = vmatpush2.xpose.msra.mxu0 0.0
    %697 = vmatprep.subr.mxu0 0.0
    %698 = vmatpush2.xpose.msra.mxu0 0.0
    %699 = vmatprep.subr.mxu0 0.0
    %700 = vmatpush2.xpose.msra.mxu0 0.0
    %701 = vmatprep.subr.mxu0 0.0
    %702 = vmatpush2.xpose.msra.mxu0 0.0
    %703 = vmatprep.subr.mxu0 0.0
    %704 = vmatpush2.xpose.msra.mxu0 0.0
    %705 = vmatprep.subr.mxu0 0.0
    %706 = vmatpush2.xpose.msra.mxu0 0.0
    %707 = vmatprep.subr.mxu0 0.0
    %708 = vmatpush2.xpose.msra.mxu0 0.0
    %709 = vmatprep.subr.mxu0 0.0
    %710 = vmatpush2.xpose.msra.mxu0 0.0
    %711 = vmatprep.subr.mxu0 0.0
    %712 = vmatpush2.xpose.msra.mxu0 0.0
    %713 = vmatprep.subr.mxu0 0.0
    %714 = vmatpush2.xpose.msra.mxu0 0.0
    %715 = vmatprep.subr.mxu0 0.0
    %716 = vmatpush2.xpose.msra.mxu0 0.0
    %717 = vmatprep.subr.mxu0 0.0
    %718 = vmatpush2.xpose.msra.mxu0 0.0
    %719 = vmatprep.subr.mxu0 0.0
    %720 = vmatpush2.xpose.msra.mxu0 0.0
    %721 = vmatprep.subr.mxu0 0.0
    %722 = vmatpush2.xpose.msra.mxu0 0.0
    %723 = vmatprep.subr.mxu0 0.0
    %724 = vmatpush2.xpose.msra.mxu0 0.0
    %725 = vmatprep.subr.mxu0 0.0
    %726 = vmatpush2.xpose.msra.mxu0 0.0
    %727 = vmatprep.mubr.f32.mxu0 0.0
    %v728 = vand.u32 %v37, 4294901760
    %v729 = vsub.f32 %v37, %v728
    %730 = vmatmul.mubr.f32.gmra.mxu0 %v729
    %v731 = vpop.f32.mrf.mxu0
    %v732 = vadd.f32 %v538, %v731
    %v733 = vpop.f32.mrf.mxu0
    %734 = vmatprep.mubr.f32.mxu0 0.0
    %v735 = vand.u32 %v38, 4294901760
    %v736 = vsub.f32 %v38, %v735
    %737 = vmatmul.mubr.f32.gmra.mxu0 %v736
    %v738 = vpop.f32.mrf.mxu0
    %v739 = vadd.f32 %v544, %v738
    %v740 = vpop.f32.mrf.mxu0
    %741 = vmatprep.mubr.f32.mxu0 0.0
    %v742 = vand.u32 %v39, 4294901760
    %v743 = vsub.f32 %v39, %v742
    %744 = vmatmul.mubr.f32.gmra.mxu0 %v743
    %v745 = vpop.f32.mrf.mxu0
    %v746 = vadd.f32 %v550, %v745
    %v747 = vpop.f32.mrf.mxu0
    %748 = vmatprep.mubr.f32.mxu0 0.0
    %v749 = vand.u32 %v40, 4294901760
    %v750 = vsub.f32 %v40, %v749
    %751 = vmatmul.mubr.f32.gmra.mxu0 %v750
    %v752 = vpop.f32.mrf.mxu0
    %v753 = vadd.f32 %v556, %v752
    %v754 = vpop.f32.mrf.mxu0
    %755 = vmatprep.mubr.f32.mxu0 0.0
    %v756 = vand.u32 %v41, 4294901760
    %v757 = vsub.f32 %v41, %v756
    %758 = vmatmul.mubr.f32.gmra.mxu0 %v757
    %v759 = vpop.f32.mrf.mxu0
    %v760 = vadd.f32 %v562, %v759
    %v761 = vpop.f32.mrf.mxu0
    %762 = vmatprep.mubr.f32.mxu0 0.0
    %v763 = vand.u32 %v42, 4294901760
    %v764 = vsub.f32 %v42, %v763
    %765 = vmatmul.mubr.f32.gmra.mxu0 %v764
    %v766 = vpop.f32.mrf.mxu0
    %v767 = vadd.f32 %v568, %v766
    %v768 = vpop.f32.mrf.mxu0
    %769 = vmatprep.mubr.f32.mxu0 0.0
    %v770 = vand.u32 %v43, 4294901760
    %v771 = vsub.f32 %v43, %v770
    %772 = vmatmul.mubr.f32.gmra.mxu0 %v771
    %v773 = vpop.f32.mrf.mxu0
    %v774 = vadd.f32 %v574, %v773
    %v775 = vpop.f32.mrf.mxu0
    %776 = vmatprep.mubr.f32.mxu0 0.0
    %v777 = vand.u32 %v44, 4294901760
    %v778 = vsub.f32 %v44, %v777
    %779 = vmatmul.mubr.f32.gmra.mxu0 %v778
    %v780 = vpop.f32.mrf.mxu0
    %v781 = vadd.f32 %v580, %v780
    %v782 = vpop.f32.mrf.mxu0
    %783 = vmatprep.mubr.f32.mxu0 0.0
    %v784 = vand.u32 %v45, 4294901760
    %v785 = vsub.f32 %v45, %v784
    %786 = vmatmul.mubr.f32.gmra.mxu0 %v785
    %v787 = vpop.f32.mrf.mxu0
    %v788 = vadd.f32 %v586, %v787
    %v789 = vpop.f32.mrf.mxu0
    %790 = vmatprep.mubr.f32.mxu0 0.0
    %v791 = vand.u32 %v46, 4294901760
    %v792 = vsub.f32 %v46, %v791
    %793 = vmatmul.mubr.f32.gmra.mxu0 %v792
    %v794 = vpop.f32.mrf.mxu0
    %v795 = vadd.f32 %v592, %v794
    %v796 = vpop.f32.mrf.mxu0
    %797 = vmatprep.mubr.f32.mxu0 0.0
    %v798 = vand.u32 %v47, 4294901760
    %v799 = vsub.f32 %v47, %v798
    %800 = vmatmul.mubr.f32.gmra.mxu0 %v799
    %v801 = vpop.f32.mrf.mxu0
    %v802 = vadd.f32 %v598, %v801
    %v803 = vpop.f32.mrf.mxu0
    %804 = vmatprep.mubr.f32.mxu0 0.0
    %v805 = vand.u32 %v48, 4294901760
    %v806 = vsub.f32 %v48, %v805
    %807 = vmatmul.mubr.f32.gmra.mxu0 %v806
    %v808 = vpop.f32.mrf.mxu0
    %v809 = vadd.f32 %v604, %v808
    %v810 = vpop.f32.mrf.mxu0
    %811 = vmatprep.mubr.f32.mxu0 0.0
    %v812 = vand.u32 %v49, 4294901760
    %v813 = vsub.f32 %v49, %v812
    %814 = vmatmul.mubr.f32.gmra.mxu0 %v813
    %v815 = vpop.f32.mrf.mxu0
    %v816 = vadd.f32 %v610, %v815
    %v817 = vpop.f32.mrf.mxu0
    %818 = vmatprep.mubr.f32.mxu0 0.0
    %v819 = vand.u32 %v50, 4294901760
    %v820 = vsub.f32 %v50, %v819
    %821 = vmatmul.mubr.f32.gmra.mxu0 %v820
    %v822 = vpop.f32.mrf.mxu0
    %v823 = vadd.f32 %v616, %v822
    %v824 = vpop.f32.mrf.mxu0
    %825 = vmatprep.mubr.f32.mxu0 0.0
    %v826 = vand.u32 %v51, 4294901760
    %v827 = vsub.f32 %v51, %v826
    %828 = vmatmul.mubr.f32.gmra.mxu0 %v827
    %v829 = vpop.f32.mrf.mxu0
    %v830 = vadd.f32 %v622, %v829
    %v831 = vpop.f32.mrf.mxu0
    %832 = vmatprep.mubr.f32.mxu0 0.0
    %v833 = vand.u32 %v52, 4294901760
    %v834 = vsub.f32 %v52, %v833
    %835 = vmatmul.mubr.f32.gmra.mxu0 %v834
    %v836 = vpop.f32.mrf.mxu0
    %v837 = vadd.f32 %v628, %v836
    %v838 = vpop.f32.mrf.mxu0
    %839 = vdwg.mxu0
    %840 = vmatprep.subr.mxu0 0.0
    %v841 = vand.u32 %v148, 4294901760
    %842 = vmatpush1.xpose.msra.mxu0 %v841
    %843 = vmatprep.subr.mxu0 0.0
    %v844 = vand.u32 %v147, 4294901760
    %845 = vmatpush1.xpose.msra.mxu0 %v844
    %846 = vmatprep.subr.mxu0 0.0
    %v847 = vand.u32 %v146, 4294901760
    %848 = vmatpush1.xpose.msra.mxu0 %v847
    %849 = vmatprep.subr.mxu0 0.0
    %v850 = vand.u32 %v145, 4294901760
    %851 = vmatpush1.xpose.msra.mxu0 %v850
    %852 = vmatprep.subr.mxu0 0.0
    %v853 = vand.u32 %v144, 4294901760
    %854 = vmatpush1.xpose.msra.mxu0 %v853
    %855 = vmatprep.subr.mxu0 0.0
    %v856 = vand.u32 %v143, 4294901760
    %857 = vmatpush1.xpose.msra.mxu0 %v856
    %858 = vmatprep.subr.mxu0 0.0
    %v859 = vand.u32 %v142, 4294901760
    %860 = vmatpush1.xpose.msra.mxu0 %v859
    %861 = vmatprep.subr.mxu0 0.0
    %v862 = vand.u32 %v141, 4294901760
    %863 = vmatpush1.xpose.msra.mxu0 %v862
    %864 = vmatprep.subr.mxu0 0.0
    %v865 = vand.u32 %v140, 4294901760
    %866 = vmatpush1.xpose.msra.mxu0 %v865
    %867 = vmatprep.subr.mxu0 0.0
    %v868 = vand.u32 %v139, 4294901760
    %869 = vmatpush1.xpose.msra.mxu0 %v868
    %870 = vmatprep.subr.mxu0 0.0
    %v871 = vand.u32 %v138, 4294901760
    %872 = vmatpush1.xpose.msra.mxu0 %v871
    %873 = vmatprep.subr.mxu0 0.0
    %v874 = vand.u32 %v137, 4294901760
    %875 = vmatpush1.xpose.msra.mxu0 %v874
    %876 = vmatprep.subr.mxu0 0.0
    %v877 = vand.u32 %v136, 4294901760
    %878 = vmatpush1.xpose.msra.mxu0 %v877
    %879 = vmatprep.subr.mxu0 0.0
    %v880 = vand.u32 %v135, 4294901760
    %881 = vmatpush1.xpose.msra.mxu0 %v880
    %882 = vmatprep.subr.mxu0 0.0
    %v883 = vand.u32 %v134, 4294901760
    %884 = vmatpush1.xpose.msra.mxu0 %v883
    %885 = vmatprep.subr.mxu0 0.0
    %v886 = vand.u32 %v133, 4294901760
    %887 = vmatpush1.xpose.msra.mxu0 %v886
    %888 = vmatprep.subr.mxu0 0.0
    %889 = vmatpush2.xpose.msra.mxu0 0.0
    %890 = vmatprep.subr.mxu0 0.0
    %891 = vmatpush2.xpose.msra.mxu0 0.0
    %892 = vmatprep.subr.mxu0 0.0
    %893 = vmatpush2.xpose.msra.mxu0 0.0
    %894 = vmatprep.subr.mxu0 0.0
    %895 = vmatpush2.xpose.msra.mxu0 0.0
    %896 = vmatprep.subr.mxu0 0.0
    %897 = vmatpush2.xpose.msra.mxu0 0.0
    %898 = vmatprep.subr.mxu0 0.0
    %899 = vmatpush2.xpose.msra.mxu0 0.0
    %900 = vmatprep.subr.mxu0 0.0
    %901 = vmatpush2.xpose.msra.mxu0 0.0
    %902 = vmatprep.subr.mxu0 0.0
    %903 = vmatpush2.xpose.msra.mxu0 0.0
    %904 = vmatprep.subr.mxu0 0.0
    %905 = vmatpush2.xpose.msra.mxu0 0.0
    %906 = vmatprep.subr.mxu0 0.0
    %907 = vmatpush2.xpose.msra.mxu0 0.0
    %908 = vmatprep.subr.mxu0 0.0
    %909 = vmatpush2.xpose.msra.mxu0 0.0
    %910 = vmatprep.subr.mxu0 0.0
    %911 = vmatpush2.xpose.msra.mxu0 0.0
    %912 = vmatprep.subr.mxu0 0.0
    %913 = vmatpush2.xpose.msra.mxu0 0.0
    %914 = vmatprep.subr.mxu0 0.0
    %915 = vmatpush2.xpose.msra.mxu0 0.0
    %916 = vmatprep.subr.mxu0 0.0
    %917 = vmatpush2.xpose.msra.mxu0 0.0
    %918 = vmatprep.subr.mxu0 0.0
    %919 = vmatpush2.xpose.msra.mxu0 0.0
    %920 = vmatprep.mubr.f32.mxu0 0.0
    %v921 = vand.u32 %v37, 4294901760
    %v922 = vsub.f32 %v37, %v921
    %v923 = vand.u32 %v922, 4294901760
    %924 = vmatmul.mubr.f32.gmra.mxu0 %v923
    %v925 = vpop.f32.mrf.mxu0
    %v926 = vadd.f32 %v732, %v925
    %v927 = vpop.f32.mrf.mxu0
    %928 = vmatprep.mubr.f32.mxu0 0.0
    %v929 = vand.u32 %v38, 4294901760
    %v930 = vsub.f32 %v38, %v929
    %v931 = vand.u32 %v930, 4294901760
    %932 = vmatmul.mubr.f32.gmra.mxu0 %v931
    %v933 = vpop.f32.mrf.mxu0
    %v934 = vadd.f32 %v739, %v933
    %v935 = vpop.f32.mrf.mxu0
    %936 = vmatprep.mubr.f32.mxu0 0.0
    %v937 = vand.u32 %v39, 4294901760
    %v938 = vsub.f32 %v39, %v937
    %v939 = vand.u32 %v938, 4294901760
    %940 = vmatmul.mubr.f32.gmra.mxu0 %v939
    %v941 = vpop.f32.mrf.mxu0
    %v942 = vadd.f32 %v746, %v941
    %v943 = vpop.f32.mrf.mxu0
    %944 = vmatprep.mubr.f32.mxu0 0.0
    %v945 = vand.u32 %v40, 4294901760
    %v946 = vsub.f32 %v40, %v945
    %v947 = vand.u32 %v946, 4294901760
    %948 = vmatmul.mubr.f32.gmra.mxu0 %v947
    %v949 = vpop.f32.mrf.mxu0
    %v950 = vadd.f32 %v753, %v949
    %v951 = vpop.f32.mrf.mxu0
    %952 = vmatprep.mubr.f32.mxu0 0.0
    %v953 = vand.u32 %v41, 4294901760
    %v954 = vsub.f32 %v41, %v953
    %v955 = vand.u32 %v954, 4294901760
    %956 = vmatmul.mubr.f32.gmra.mxu0 %v955
    %v957 = vpop.f32.mrf.mxu0
    %v958 = vadd.f32 %v760, %v957
    %v959 = vpop.f32.mrf.mxu0
    %960 = vmatprep.mubr.f32.mxu0 0.0
    %v961 = vand.u32 %v42, 4294901760
    %v962 = vsub.f32 %v42, %v961
    %v963 = vand.u32 %v962, 4294901760
    %964 = vmatmul.mubr.f32.gmra.mxu0 %v963
    %v965 = vpop.f32.mrf.mxu0
    %v966 = vadd.f32 %v767, %v965
    %v967 = vpop.f32.mrf.mxu0
    %968 = vmatprep.mubr.f32.mxu0 0.0
    %v969 = vand.u32 %v43, 4294901760
    %v970 = vsub.f32 %v43, %v969
    %v971 = vand.u32 %v970, 4294901760
    %972 = vmatmul.mubr.f32.gmra.mxu0 %v971
    %v973 = vpop.f32.mrf.mxu0
    %v974 = vadd.f32 %v774, %v973
    %v975 = vpop.f32.mrf.mxu0
    %976 = vmatprep.mubr.f32.mxu0 0.0
    %v977 = vand.u32 %v44, 4294901760
    %v978 = vsub.f32 %v44, %v977
    %v979 = vand.u32 %v978, 4294901760
    %980 = vmatmul.mubr.f32.gmra.mxu0 %v979
    %v981 = vpop.f32.mrf.mxu0
    %v982 = vadd.f32 %v781, %v981
    %v983 = vpop.f32.mrf.mxu0
    %984 = vmatprep.mubr.f32.mxu0 0.0
    %v985 = vand.u32 %v45, 4294901760
    %v986 = vsub.f32 %v45, %v985
    %v987 = vand.u32 %v986, 4294901760
    %988 = vmatmul.mubr.f32.gmra.mxu0 %v987
    %v989 = vpop.f32.mrf.mxu0
    %v990 = vadd.f32 %v788, %v989
    %v991 = vpop.f32.mrf.mxu0
    %992 = vmatprep.mubr.f32.mxu0 0.0
    %v993 = vand.u32 %v46, 4294901760
    %v994 = vsub.f32 %v46, %v993
    %v995 = vand.u32 %v994, 4294901760
    %996 = vmatmul.mubr.f32.gmra.mxu0 %v995
    %v997 = vpop.f32.mrf.mxu0
    %v998 = vadd.f32 %v795, %v997
    %v999 = vpop.f32.mrf.mxu0
    %1000 = vmatprep.mubr.f32.mxu0 0.0
    %v1001 = vand.u32 %v47, 4294901760
    %v1002 = vsub.f32 %v47, %v1001
    %v1003 = vand.u32 %v1002, 4294901760
    %1004 = vmatmul.mubr.f32.gmra.mxu0 %v1003
    %v1005 = vpop.f32.mrf.mxu0
    %v1006 = vadd.f32 %v802, %v1005
    %v1007 = vpop.f32.mrf.mxu0
    %1008 = vmatprep.mubr.f32.mxu0 0.0
    %v1009 = vand.u32 %v48, 4294901760
    %v1010 = vsub.f32 %v48, %v1009
    %v1011 = vand.u32 %v1010, 4294901760
    %1012 = vmatmul.mubr.f32.gmra.mxu0 %v1011
    %v1013 = vpop.f32.mrf.mxu0
    %v1014 = vadd.f32 %v809, %v1013
    %v1015 = vpop.f32.mrf.mxu0
    %1016 = vmatprep.mubr.f32.mxu0 0.0
    %v1017 = vand.u32 %v49, 4294901760
    %v1018 = vsub.f32 %v49, %v1017
    %v1019 = vand.u32 %v1018, 4294901760
    %1020 = vmatmul.mubr.f32.gmra.mxu0 %v1019
    %v1021 = vpop.f32.mrf.mxu0
    %v1022 = vadd.f32 %v816, %v1021
    %v1023 = vpop.f32.mrf.mxu0
    %1024 = vmatprep.mubr.f32.mxu0 0.0
    %v1025 = vand.u32 %v50, 4294901760
    %v1026 = vsub.f32 %v50, %v1025
    %v1027 = vand.u32 %v1026, 4294901760
    %1028 = vmatmul.mubr.f32.gmra.mxu0 %v1027
    %v1029 = vpop.f32.mrf.mxu0
    %v1030 = vadd.f32 %v823, %v1029
    %v1031 = vpop.f32.mrf.mxu0
    %1032 = vmatprep.mubr.f32.mxu0 0.0
    %v1033 = vand.u32 %v51, 4294901760
    %v1034 = vsub.f32 %v51, %v1033
    %v1035 = vand.u32 %v1034, 4294901760
    %1036 = vmatmul.mubr.f32.gmra.mxu0 %v1035
    %v1037 = vpop.f32.mrf.mxu0
    %v1038 = vadd.f32 %v830, %v1037
    %v1039 = vpop.f32.mrf.mxu0
    %1040 = vmatprep.mubr.f32.mxu0 0.0
    %v1041 = vand.u32 %v52, 4294901760
    %v1042 = vsub.f32 %v52, %v1041
    %v1043 = vand.u32 %v1042, 4294901760
    %1044 = vmatmul.mubr.f32.gmra.mxu0 %v1043
    %v1045 = vpop.f32.mrf.mxu0
    %v1046 = vadd.f32 %v837, %v1045
    %v1047 = vpop.f32.mrf.mxu0
    %1048 = vdwg.mxu0
    %1049 = vmatprep.subr.mxu0 0.0
    %v1050 = vand.u32 %v148, 4294901760
    %v1051 = vsub.f32 %v148, %v1050
    %v1052 = vand.u32 %v1051, 4294901760
    %1053 = vmatpush1.xpose.msra.mxu0 %v1052
    %1054 = vmatprep.subr.mxu0 0.0
    %v1055 = vand.u32 %v147, 4294901760
    %v1056 = vsub.f32 %v147, %v1055
    %v1057 = vand.u32 %v1056, 4294901760
    %1058 = vmatpush1.xpose.msra.mxu0 %v1057
    %1059 = vmatprep.subr.mxu0 0.0
    %v1060 = vand.u32 %v146, 4294901760
    %v1061 = vsub.f32 %v146, %v1060
    %v1062 = vand.u32 %v1061, 4294901760
    %1063 = vmatpush1.xpose.msra.mxu0 %v1062
    %1064 = vmatprep.subr.mxu0 0.0
    %v1065 = vand.u32 %v145, 4294901760
    %v1066 = vsub.f32 %v145, %v1065
    %v1067 = vand.u32 %v1066, 4294901760
    %1068 = vmatpush1.xpose.msra.mxu0 %v1067
    %1069 = vmatprep.subr.mxu0 0.0
    %v1070 = vand.u32 %v144, 4294901760
    %v1071 = vsub.f32 %v144, %v1070
    %v1072 = vand.u32 %v1071, 4294901760
    %1073 = vmatpush1.xpose.msra.mxu0 %v1072
    %1074 = vmatprep.subr.mxu0 0.0
    %v1075 = vand.u32 %v143, 4294901760
    %v1076 = vsub.f32 %v143, %v1075
    %v1077 = vand.u32 %v1076, 4294901760
    %1078 = vmatpush1.xpose.msra.mxu0 %v1077
    %1079 = vmatprep.subr.mxu0 0.0
    %v1080 = vand.u32 %v142, 4294901760
    %v1081 = vsub.f32 %v142, %v1080
    %v1082 = vand.u32 %v1081, 4294901760
    %1083 = vmatpush1.xpose.msra.mxu0 %v1082
    %1084 = vmatprep.subr.mxu0 0.0
    %v1085 = vand.u32 %v141, 4294901760
    %v1086 = vsub.f32 %v141, %v1085
    %v1087 = vand.u32 %v1086, 4294901760
    %1088 = vmatpush1.xpose.msra.mxu0 %v1087
    %1089 = vmatprep.subr.mxu0 0.0
    %v1090 = vand.u32 %v140, 4294901760
    %v1091 = vsub.f32 %v140, %v1090
    %v1092 = vand.u32 %v1091, 4294901760
    %1093 = vmatpush1.xpose.msra.mxu0 %v1092
    %1094 = vmatprep.subr.mxu0 0.0
    %v1095 = vand.u32 %v139, 4294901760
    %v1096 = vsub.f32 %v139, %v1095
    %v1097 = vand.u32 %v1096, 4294901760
    %1098 = vmatpush1.xpose.msra.mxu0 %v1097
    %1099 = vmatprep.subr.mxu0 0.0
    %v1100 = vand.u32 %v138, 4294901760
    %v1101 = vsub.f32 %v138, %v1100
    %v1102 = vand.u32 %v1101, 4294901760
    %1103 = vmatpush1.xpose.msra.mxu0 %v1102
    %1104 = vmatprep.subr.mxu0 0.0
    %v1105 = vand.u32 %v137, 4294901760
    %v1106 = vsub.f32 %v137, %v1105
    %v1107 = vand.u32 %v1106, 4294901760
    %1108 = vmatpush1.xpose.msra.mxu0 %v1107
    %1109 = vmatprep.subr.mxu0 0.0
    %v1110 = vand.u32 %v136, 4294901760
    %v1111 = vsub.f32 %v136, %v1110
    %v1112 = vand.u32 %v1111, 4294901760
    %1113 = vmatpush1.xpose.msra.mxu0 %v1112
    %1114 = vmatprep.subr.mxu0 0.0
    %v1115 = vand.u32 %v135, 4294901760
    %v1116 = vsub.f32 %v135, %v1115
    %v1117 = vand.u32 %v1116, 4294901760
    %1118 = vmatpush1.xpose.msra.mxu0 %v1117
    %1119 = vmatprep.subr.mxu0 0.0
    %v1120 = vand.u32 %v134, 4294901760
    %v1121 = vsub.f32 %v134, %v1120
    %v1122 = vand.u32 %v1121, 4294901760
    %1123 = vmatpush1.xpose.msra.mxu0 %v1122
    %1124 = vmatprep.subr.mxu0 0.0
    %v1125 = vand.u32 %v133, 4294901760
    %v1126 = vsub.f32 %v133, %v1125
    %v1127 = vand.u32 %v1126, 4294901760
    %1128 = vmatpush1.xpose.msra.mxu0 %v1127
    %1129 = vmatprep.subr.mxu0 0.0
    %1130 = vmatpush2.xpose.msra.mxu0 0.0
    %1131 = vmatprep.subr.mxu0 0.0
    %1132 = vmatpush2.xpose.msra.mxu0 0.0
    %1133 = vmatprep.subr.mxu0 0.0
    %1134 = vmatpush2.xpose.msra.mxu0 0.0
    %1135 = vmatprep.subr.mxu0 0.0
    %1136 = vmatpush2.xpose.msra.mxu0 0.0
    %1137 = vmatprep.subr.mxu0 0.0
    %1138 = vmatpush2.xpose.msra.mxu0 0.0
    %1139 = vmatprep.subr.mxu0 0.0
    %1140 = vmatpush2.xpose.msra.mxu0 0.0
    %1141 = vmatprep.subr.mxu0 0.0
    %1142 = vmatpush2.xpose.msra.mxu0 0.0
    %1143 = vmatprep.subr.mxu0 0.0
    %1144 = vmatpush2.xpose.msra.mxu0 0.0
    %1145 = vmatprep.subr.mxu0 0.0
    %1146 = vmatpush2.xpose.msra.mxu0 0.0
    %1147 = vmatprep.subr.mxu0 0.0
    %1148 = vmatpush2.xpose.msra.mxu0 0.0
    %1149 = vmatprep.subr.mxu0 0.0
    %1150 = vmatpush2.xpose.msra.mxu0 0.0
    %1151 = vmatprep.subr.mxu0 0.0
    %1152 = vmatpush2.xpose.msra.mxu0 0.0
    %1153 = vmatprep.subr.mxu0 0.0
    %1154 = vmatpush2.xpose.msra.mxu0 0.0
    %1155 = vmatprep.subr.mxu0 0.0
    %1156 = vmatpush2.xpose.msra.mxu0 0.0
    %1157 = vmatprep.subr.mxu0 0.0
    %1158 = vmatpush2.xpose.msra.mxu0 0.0
    %1159 = vmatprep.subr.mxu0 0.0
    %1160 = vmatpush2.xpose.msra.mxu0 0.0
    %1161 = vmatprep.mubr.f32.mxu0 0.0
    %v1162 = vand.u32 %v37, 4294901760
    %1163 = vmatmul.mubr.f32.gmra.mxu0 %v1162
    %v1164 = vpop.f32.mrf.mxu0
    %v1165 = vadd.f32 %v926, %v1164
    %v1166 = vpop.f32.mrf.mxu0
    %1167 = vmatprep.mubr.f32.mxu0 0.0
    %v1168 = vand.u32 %v38, 4294901760
    %1169 = vmatmul.mubr.f32.gmra.mxu0 %v1168
    %v1170 = vpop.f32.mrf.mxu0
    %v1171 = vadd.f32 %v934, %v1170
    %v1172 = vpop.f32.mrf.mxu0
    %1173 = vmatprep.mubr.f32.mxu0 0.0
    %v1174 = vand.u32 %v39, 4294901760
    %1175 = vmatmul.mubr.f32.gmra.mxu0 %v1174
    %v1176 = vpop.f32.mrf.mxu0
    %v1177 = vadd.f32 %v942, %v1176
    %v1178 = vpop.f32.mrf.mxu0
    %1179 = vmatprep.mubr.f32.mxu0 0.0
    %v1180 = vand.u32 %v40, 4294901760
    %1181 = vmatmul.mubr.f32.gmra.mxu0 %v1180
    %v1182 = vpop.f32.mrf.mxu0
    %v1183 = vadd.f32 %v950, %v1182
    %v1184 = vpop.f32.mrf.mxu0
    %1185 = vmatprep.mubr.f32.mxu0 0.0
    %v1186 = vand.u32 %v41, 4294901760
    %1187 = vmatmul.mubr.f32.gmra.mxu0 %v1186
    %v1188 = vpop.f32.mrf.mxu0
    %v1189 = vadd.f32 %v958, %v1188
    %v1190 = vpop.f32.mrf.mxu0
    %1191 = vmatprep.mubr.f32.mxu0 0.0
    %v1192 = vand.u32 %v42, 4294901760
    %1193 = vmatmul.mubr.f32.gmra.mxu0 %v1192
    %v1194 = vpop.f32.mrf.mxu0
    %v1195 = vadd.f32 %v966, %v1194
    %v1196 = vpop.f32.mrf.mxu0
    %1197 = vmatprep.mubr.f32.mxu0 0.0
    %v1198 = vand.u32 %v43, 4294901760
    %1199 = vmatmul.mubr.f32.gmra.mxu0 %v1198
    %v1200 = vpop.f32.mrf.mxu0
    %v1201 = vadd.f32 %v974, %v1200
    %v1202 = vpop.f32.mrf.mxu0
    %1203 = vmatprep.mubr.f32.mxu0 0.0
    %v1204 = vand.u32 %v44, 4294901760
    %1205 = vmatmul.mubr.f32.gmra.mxu0 %v1204
    %v1206 = vpop.f32.mrf.mxu0
    %v1207 = vadd.f32 %v982, %v1206
    %v1208 = vpop.f32.mrf.mxu0
    %1209 = vmatprep.mubr.f32.mxu0 0.0
    %v1210 = vand.u32 %v45, 4294901760
    %1211 = vmatmul.mubr.f32.gmra.mxu0 %v1210
    %v1212 = vpop.f32.mrf.mxu0
    %v1213 = vadd.f32 %v990, %v1212
    %v1214 = vpop.f32.mrf.mxu0
    %1215 = vmatprep.mubr.f32.mxu0 0.0
    %v1216 = vand.u32 %v46, 4294901760
    %1217 = vmatmul.mubr.f32.gmra.mxu0 %v1216
    %v1218 = vpop.f32.mrf.mxu0
    %v1219 = vadd.f32 %v998, %v1218
    %v1220 = vpop.f32.mrf.mxu0
    %1221 = vmatprep.mubr.f32.mxu0 0.0
    %v1222 = vand.u32 %v47, 4294901760
    %1223 = vmatmul.mubr.f32.gmra.mxu0 %v1222
    %v1224 = vpop.f32.mrf.mxu0
    %v1225 = vadd.f32 %v1006, %v1224
    %v1226 = vpop.f32.mrf.mxu0
    %1227 = vmatprep.mubr.f32.mxu0 0.0
    %v1228 = vand.u32 %v48, 4294901760
    %1229 = vmatmul.mubr.f32.gmra.mxu0 %v1228
    %v1230 = vpop.f32.mrf.mxu0
    %v1231 = vadd.f32 %v1014, %v1230
    %v1232 = vpop.f32.mrf.mxu0
    %1233 = vmatprep.mubr.f32.mxu0 0.0
    %v1234 = vand.u32 %v49, 4294901760
    %1235 = vmatmul.mubr.f32.gmra.mxu0 %v1234
    %v1236 = vpop.f32.mrf.mxu0
    %v1237 = vadd.f32 %v1022, %v1236
    %v1238 = vpop.f32.mrf.mxu0
    %1239 = vmatprep.mubr.f32.mxu0 0.0
    %v1240 = vand.u32 %v50, 4294901760
    %1241 = vmatmul.mubr.f32.gmra.mxu0 %v1240
    %v1242 = vpop.f32.mrf.mxu0
    %v1243 = vadd.f32 %v1030, %v1242
    %v1244 = vpop.f32.mrf.mxu0
    %1245 = vmatprep.mubr.f32.mxu0 0.0
    %v1246 = vand.u32 %v51, 4294901760
    %1247 = vmatmul.mubr.f32.gmra.mxu0 %v1246
    %v1248 = vpop.f32.mrf.mxu0
    %v1249 = vadd.f32 %v1038, %v1248
    %v1250 = vpop.f32.mrf.mxu0
    %1251 = vmatprep.mubr.f32.mxu0 0.0
    %v1252 = vand.u32 %v52, 4294901760
    %1253 = vmatmul.mubr.f32.gmra.mxu0 %v1252
    %v1254 = vpop.f32.mrf.mxu0
    %v1255 = vadd.f32 %v1046, %v1254
    %v1256 = vpop.f32.mrf.mxu0
    %1257 = vdwg.mxu0
    %1258 = vmatprep.subr.mxu0 0.0
    %v1259 = vand.u32 %v148, 4294901760
    %1260 = vmatpush1.xpose.msra.mxu0 %v1259
    %1261 = vmatprep.subr.mxu0 0.0
    %v1262 = vand.u32 %v147, 4294901760
    %1263 = vmatpush1.xpose.msra.mxu0 %v1262
    %1264 = vmatprep.subr.mxu0 0.0
    %v1265 = vand.u32 %v146, 4294901760
    %1266 = vmatpush1.xpose.msra.mxu0 %v1265
    %1267 = vmatprep.subr.mxu0 0.0
    %v1268 = vand.u32 %v145, 4294901760
    %1269 = vmatpush1.xpose.msra.mxu0 %v1268
    %1270 = vmatprep.subr.mxu0 0.0
    %v1271 = vand.u32 %v144, 4294901760
    %1272 = vmatpush1.xpose.msra.mxu0 %v1271
    %1273 = vmatprep.subr.mxu0 0.0
    %v1274 = vand.u32 %v143, 4294901760
    %1275 = vmatpush1.xpose.msra.mxu0 %v1274
    %1276 = vmatprep.subr.mxu0 0.0
    %v1277 = vand.u32 %v142, 4294901760
    %1278 = vmatpush1.xpose.msra.mxu0 %v1277
    %1279 = vmatprep.subr.mxu0 0.0
    %v1280 = vand.u32 %v141, 4294901760
    %1281 = vmatpush1.xpose.msra.mxu0 %v1280
    %1282 = vmatprep.subr.mxu0 0.0
    %v1283 = vand.u32 %v140, 4294901760
    %1284 = vmatpush1.xpose.msra.mxu0 %v1283
    %1285 = vmatprep.subr.mxu0 0.0
    %v1286 = vand.u32 %v139, 4294901760
    %1287 = vmatpush1.xpose.msra.mxu0 %v1286
    %1288 = vmatprep.subr.mxu0 0.0
    %v1289 = vand.u32 %v138, 4294901760
    %1290 = vmatpush1.xpose.msra.mxu0 %v1289
    %1291 = vmatprep.subr.mxu0 0.0
    %v1292 = vand.u32 %v137, 4294901760
    %1293 = vmatpush1.xpose.msra.mxu0 %v1292
    %1294 = vmatprep.subr.mxu0 0.0
    %v1295 = vand.u32 %v136, 4294901760
    %1296 = vmatpush1.xpose.msra.mxu0 %v1295
    %1297 = vmatprep.subr.mxu0 0.0
    %v1298 = vand.u32 %v135, 4294901760
    %1299 = vmatpush1.xpose.msra.mxu0 %v1298
    %1300 = vmatprep.subr.mxu0 0.0
    %v1301 = vand.u32 %v134, 4294901760
    %1302 = vmatpush1.xpose.msra.mxu0 %v1301
    %1303 = vmatprep.subr.mxu0 0.0
    %v1304 = vand.u32 %v133, 4294901760
    %1305 = vmatpush1.xpose.msra.mxu0 %v1304
    %1306 = vmatprep.subr.mxu0 0.0
    %1307 = vmatpush2.xpose.msra.mxu0 0.0
    %1308 = vmatprep.subr.mxu0 0.0
    %1309 = vmatpush2.xpose.msra.mxu0 0.0
    %1310 = vmatprep.subr.mxu0 0.0
    %1311 = vmatpush2.xpose.msra.mxu0 0.0
    %1312 = vmatprep.subr.mxu0 0.0
    %1313 = vmatpush2.xpose.msra.mxu0 0.0
    %1314 = vmatprep.subr.mxu0 0.0
    %1315 = vmatpush2.xpose.msra.mxu0 0.0
    %1316 = vmatprep.subr.mxu0 0.0
    %1317 = vmatpush2.xpose.msra.mxu0 0.0
    %1318 = vmatprep.subr.mxu0 0.0
    %1319 = vmatpush2.xpose.msra.mxu0 0.0
    %1320 = vmatprep.subr.mxu0 0.0
    %1321 = vmatpush2.xpose.msra.mxu0 0.0
    %1322 = vmatprep.subr.mxu0 0.0
    %1323 = vmatpush2.xpose.msra.mxu0 0.0
    %1324 = vmatprep.subr.mxu0 0.0
    %1325 = vmatpush2.xpose.msra.mxu0 0.0
    %1326 = vmatprep.subr.mxu0 0.0
    %1327 = vmatpush2.xpose.msra.mxu0 0.0
    %1328 = vmatprep.subr.mxu0 0.0
    %1329 = vmatpush2.xpose.msra.mxu0 0.0
    %1330 = vmatprep.subr.mxu0 0.0
    %1331 = vmatpush2.xpose.msra.mxu0 0.0
    %1332 = vmatprep.subr.mxu0 0.0
    %1333 = vmatpush2.xpose.msra.mxu0 0.0
    %1334 = vmatprep.subr.mxu0 0.0
    %1335 = vmatpush2.xpose.msra.mxu0 0.0
    %1336 = vmatprep.subr.mxu0 0.0
    %1337 = vmatpush2.xpose.msra.mxu0 0.0
    %1338 = vmatprep.mubr.f32.mxu0 0.0
    %v1339 = vand.u32 %v37, 4294901760
    %1340 = vmatmul.mubr.f32.gmra.mxu0 %v1339
    %v1341 = vpop.f32.mrf.mxu0
    %v1342 = vadd.f32 %v1165, %v1341
    %v1343 = vpop.f32.mrf.mxu0
    %1344 = vmatprep.mubr.f32.mxu0 0.0
    %v1345 = vand.u32 %v38, 4294901760
    %1346 = vmatmul.mubr.f32.gmra.mxu0 %v1345
    %v1347 = vpop.f32.mrf.mxu0
    %v1348 = vadd.f32 %v1171, %v1347
    %v1349 = vpop.f32.mrf.mxu0
    %1350 = vmatprep.mubr.f32.mxu0 0.0
    %v1351 = vand.u32 %v39, 4294901760
    %1352 = vmatmul.mubr.f32.gmra.mxu0 %v1351
    %v1353 = vpop.f32.mrf.mxu0
    %v1354 = vadd.f32 %v1177, %v1353
    %v1355 = vpop.f32.mrf.mxu0
    %1356 = vmatprep.mubr.f32.mxu0 0.0
    %v1357 = vand.u32 %v40, 4294901760
    %1358 = vmatmul.mubr.f32.gmra.mxu0 %v1357
    %v1359 = vpop.f32.mrf.mxu0
    %v1360 = vadd.f32 %v1183, %v1359
    %v1361 = vpop.f32.mrf.mxu0
    %1362 = vmatprep.mubr.f32.mxu0 0.0
    %v1363 = vand.u32 %v41, 4294901760
    %1364 = vmatmul.mubr.f32.gmra.mxu0 %v1363
    %v1365 = vpop.f32.mrf.mxu0
    %v1366 = vadd.f32 %v1189, %v1365
    %v1367 = vpop.f32.mrf.mxu0
    %1368 = vmatprep.mubr.f32.mxu0 0.0
    %v1369 = vand.u32 %v42, 4294901760
    %1370 = vmatmul.mubr.f32.gmra.mxu0 %v1369
    %v1371 = vpop.f32.mrf.mxu0
    %v1372 = vadd.f32 %v1195, %v1371
    %v1373 = vpop.f32.mrf.mxu0
    %1374 = vmatprep.mubr.f32.mxu0 0.0
    %v1375 = vand.u32 %v43, 4294901760
    %1376 = vmatmul.mubr.f32.gmra.mxu0 %v1375
    %v1377 = vpop.f32.mrf.mxu0
    %v1378 = vadd.f32 %v1201, %v1377
    %v1379 = vpop.f32.mrf.mxu0
    %1380 = vmatprep.mubr.f32.mxu0 0.0
    %v1381 = vand.u32 %v44, 4294901760
    %1382 = vmatmul.mubr.f32.gmra.mxu0 %v1381
    %v1383 = vpop.f32.mrf.mxu0
    %v1384 = vadd.f32 %v1207, %v1383
    %v1385 = vpop.f32.mrf.mxu0
    %1386 = vmatprep.mubr.f32.mxu0 0.0
    %v1387 = vand.u32 %v45, 4294901760
    %1388 = vmatmul.mubr.f32.gmra.mxu0 %v1387
    %v1389 = vpop.f32.mrf.mxu0
    %v1390 = vadd.f32 %v1213, %v1389
    %v1391 = vpop.f32.mrf.mxu0
    %1392 = vmatprep.mubr.f32.mxu0 0.0
    %v1393 = vand.u32 %v46, 4294901760
    %1394 = vmatmul.mubr.f32.gmra.mxu0 %v1393
    %v1395 = vpop.f32.mrf.mxu0
    %v1396 = vadd.f32 %v1219, %v1395
    %v1397 = vpop.f32.mrf.mxu0
    %1398 = vmatprep.mubr.f32.mxu0 0.0
    %v1399 = vand.u32 %v47, 4294901760
    %1400 = vmatmul.mubr.f32.gmra.mxu0 %v1399
    %v1401 = vpop.f32.mrf.mxu0
    %v1402 = vadd.f32 %v1225, %v1401
    %v1403 = vpop.f32.mrf.mxu0
    %1404 = vmatprep.mubr.f32.mxu0 0.0
    %v1405 = vand.u32 %v48, 4294901760
    %1406 = vmatmul.mubr.f32.gmra.mxu0 %v1405
    %v1407 = vpop.f32.mrf.mxu0
    %v1408 = vadd.f32 %v1231, %v1407
    %v1409 = vpop.f32.mrf.mxu0
    %1410 = vmatprep.mubr.f32.mxu0 0.0
    %v1411 = vand.u32 %v49, 4294901760
    %1412 = vmatmul.mubr.f32.gmra.mxu0 %v1411
    %v1413 = vpop.f32.mrf.mxu0
    %v1414 = vadd.f32 %v1237, %v1413
    %v1415 = vpop.f32.mrf.mxu0
    %1416 = vmatprep.mubr.f32.mxu0 0.0
    %v1417 = vand.u32 %v50, 4294901760
    %1418 = vmatmul.mubr.f32.gmra.mxu0 %v1417
    %v1419 = vpop.f32.mrf.mxu0
    %v1420 = vadd.f32 %v1243, %v1419
    %v1421 = vpop.f32.mrf.mxu0
    %1422 = vmatprep.mubr.f32.mxu0 0.0
    %v1423 = vand.u32 %v51, 4294901760
    %1424 = vmatmul.mubr.f32.gmra.mxu0 %v1423
    %v1425 = vpop.f32.mrf.mxu0
    %v1426 = vadd.f32 %v1249, %v1425
    %v1427 = vpop.f32.mrf.mxu0
    %1428 = vmatprep.mubr.f32.mxu0 0.0
    %v1429 = vand.u32 %v52, 4294901760
    %1430 = vmatmul.mubr.f32.gmra.mxu0 %v1429
    %v1431 = vpop.f32.mrf.mxu0
    %v1432 = vadd.f32 %v1255, %v1431
    %v1433 = vpop.f32.mrf.mxu0
    %1434 = vdwg.mxu0
    %v1435 = vmul.f32 %v1342, %v117
    %v1436 = vmul.f32 %v1348, %v118
    %v1437 = vmul.f32 %v1354, %v119
    %v1438 = vmul.f32 %v1360, %v120
    %v1439 = vmul.f32 %v1366, %v121
    %v1440 = vmul.f32 %v1372, %v122
    %v1441 = vmul.f32 %v1378, %v123
    %v1442 = vmul.f32 %v1384, %v124
    %v1443 = vmul.f32 %v1390, %v125
    %v1444 = vmul.f32 %v1396, %v126
    %v1445 = vmul.f32 %v1402, %v127
    %v1446 = vmul.f32 %v1408, %v128
    %v1447 = vmul.f32 %v1414, %v129
    %v1448 = vmul.f32 %v1420, %v130
    %v1449 = vmul.f32 %v1426, %v131
    %v1450 = vmul.f32 %v1432, %v132
    %v1451 = vld [vmem:[%s1] sm:$0x1]
    %v1453 = vlaneseq
    %v1454 = vshrl.u32 %v1453, 7
    %v1455 = vsub.s32 0, %v1454
    %v1456 = vrot.slane %v1451, %v1455
    %v1458 = vsub.f32 %v1435, %v1456
    %v1459 = vsub.f32 %v1436, %v1456
    %v1460 = vsub.f32 %v1437, %v1456
    %v1461 = vsub.f32 %v1438, %v1456
    %v1462 = vsub.f32 %v1439, %v1456
    %v1463 = vsub.f32 %v1440, %v1456
    %v1464 = vsub.f32 %v1441, %v1456
    %v1465 = vsub.f32 %v1442, %v1456
    %v1466 = vsub.f32 %v1443, %v1456
    %v1467 = vsub.f32 %v1444, %v1456
    %v1468 = vsub.f32 %v1445, %v1456
    %v1469 = vsub.f32 %v1446, %v1456
    %v1470 = vsub.f32 %v1447, %v1456
    %v1471 = vsub.f32 %v1448, %v1456
    %v1472 = vsub.f32 %v1449, %v1456
    %v1473 = vsub.f32 %v1450, %v1456
    %v1474 = vld [vmem:[%s2] sm:$0xff]
    %v1475 = vld [vmem:[%s2 + $0x8] sm:$0xff]
    %v1476 = vld [vmem:[%s2 + $0x10] sm:$0xff]
    %v1477 = vld [vmem:[%s2 + $0x18] sm:$0xff]
    %v1478 = vld [vmem:[%s2 + $0x20] sm:$0xff]
    %v1479 = vld [vmem:[%s2 + $0x28] sm:$0xff]
    %v1480 = vld [vmem:[%s2 + $0x30] sm:$0xff]
    %v1481 = vld [vmem:[%s2 + $0x38] sm:$0xff]
    %v1482 = vld [vmem:[%s2 + $0x40] sm:$0xff]
    %v1483 = vld [vmem:[%s2 + $0x48] sm:$0xff]
    %v1484 = vld [vmem:[%s2 + $0x50] sm:$0xff]
    %v1485 = vld [vmem:[%s2 + $0x58] sm:$0xff]
    %v1486 = vld [vmem:[%s2 + $0x60] sm:$0xff]
    %v1487 = vld [vmem:[%s2 + $0x68] sm:$0xff]
    %v1488 = vld [vmem:[%s2 + $0x70] sm:$0xff]
    %v1489 = vld [vmem:[%s2 + $0x78] sm:$0xff]
    %1491 = vset.pattern.permute.xlu0 0
    %1492 = vperm.xlu0 %1491, %v1474
    %v1493 = vpop.permute.xlu0 %1492
    %1496 = vset.pattern.permute.xlu0 0
    %1497 = vperm.xlu0 %1496, %v1475
    %v1498 = vpop.permute.xlu0 %1497
    %1501 = vset.pattern.permute.xlu0 0
    %1502 = vperm.xlu0 %1501, %v1476
    %v1503 = vpop.permute.xlu0 %1502
    %1506 = vset.pattern.permute.xlu0 0
    %1507 = vperm.xlu0 %1506, %v1477
    %v1508 = vpop.permute.xlu0 %1507
    %1511 = vset.pattern.permute.xlu0 0
    %1512 = vperm.xlu0 %1511, %v1478
    %v1513 = vpop.permute.xlu0 %1512
    %1516 = vset.pattern.permute.xlu0 0
    %1517 = vperm.xlu0 %1516, %v1479
    %v1518 = vpop.permute.xlu0 %1517
    %1521 = vset.pattern.permute.xlu0 0
    %1522 = vperm.xlu0 %1521, %v1480
    %v1523 = vpop.permute.xlu0 %1522
    %1526 = vset.pattern.permute.xlu0 0
    %1527 = vperm.xlu0 %1526, %v1481
    %v1528 = vpop.permute.xlu0 %1527
    %1531 = vset.pattern.permute.xlu0 0
    %1532 = vperm.xlu0 %1531, %v1482
    %v1533 = vpop.permute.xlu0 %1532
    %1536 = vset.pattern.permute.xlu0 0
    %1537 = vperm.xlu0 %1536, %v1483
    %v1538 = vpop.permute.xlu0 %1537
    %1541 = vset.pattern.permute.xlu0 0
    %1542 = vperm.xlu0 %1541, %v1484
    %v1543 = vpop.permute.xlu0 %1542
    %1546 = vset.pattern.permute.xlu0 0
    %1547 = vperm.xlu0 %1546, %v1485
    %v1548 = vpop.permute.xlu0 %1547
    %1551 = vset.pattern.permute.xlu0 0
    %1552 = vperm.xlu0 %1551, %v1486
    %v1553 = vpop.permute.xlu0 %1552
    %1556 = vset.pattern.permute.xlu0 0
    %1557 = vperm.xlu0 %1556, %v1487
    %v1558 = vpop.permute.xlu0 %1557
    %1561 = vset.pattern.permute.xlu0 0
    %1562 = vperm.xlu0 %1561, %v1488
    %v1563 = vpop.permute.xlu0 %1562
    %1566 = vset.pattern.permute.xlu0 0
    %1567 = vperm.xlu0 %1566, %v1489
    %v1568 = vpop.permute.xlu0 %1567
    %v1570 = vadd.f32 %v1458, %v1493
    %v1571 = vadd.f32 %v1459, %v1498
    %v1572 = vadd.f32 %v1460, %v1503
    %v1573 = vadd.f32 %v1461, %v1508
    %v1574 = vadd.f32 %v1462, %v1513
    %v1575 = vadd.f32 %v1463, %v1518
    %v1576 = vadd.f32 %v1464, %v1523
    %v1577 = vadd.f32 %v1465, %v1528
    %v1578 = vadd.f32 %v1466, %v1533
    %v1579 = vadd.f32 %v1467, %v1538
    %v1580 = vadd.f32 %v1468, %v1543
    %v1581 = vadd.f32 %v1469, %v1548
    %v1582 = vadd.f32 %v1470, %v1553
    %v1583 = vadd.f32 %v1471, %v1558
    %v1584 = vadd.f32 %v1472, %v1563
    %v1585 = vadd.f32 %v1473, %v1568
    %v1586 = vld [vmem:[#allocation2] sm:$0x1]
    %v1587 = vmul.f32 %v1570, 1.442695
    %v1588 = vpow.pop %v1587
    %v1589 = vmul.f32 %v1571, 1.442695
    %v1590 = vpow.pop %v1589
    %v1591 = vmul.f32 %v1572, 1.442695
    %v1592 = vpow.pop %v1591
    %v1593 = vmul.f32 %v1573, 1.442695
    %v1594 = vpow.pop %v1593
    %v1595 = vmul.f32 %v1574, 1.442695
    %v1596 = vpow.pop %v1595
    %v1597 = vmul.f32 %v1575, 1.442695
    %v1598 = vpow.pop %v1597
    %v1599 = vmul.f32 %v1576, 1.442695
    %v1600 = vpow.pop %v1599
    %v1601 = vmul.f32 %v1577, 1.442695
    %v1602 = vpow.pop %v1601
    %v1603 = vmul.f32 %v1578, 1.442695
    %v1604 = vpow.pop %v1603
    %v1605 = vmul.f32 %v1579, 1.442695
    %v1606 = vpow.pop %v1605
    %v1607 = vmul.f32 %v1580, 1.442695
    %v1608 = vpow.pop %v1607
    %v1609 = vmul.f32 %v1581, 1.442695
    %v1610 = vpow.pop %v1609
    %v1611 = vmul.f32 %v1582, 1.442695
    %v1612 = vpow.pop %v1611
    %v1613 = vmul.f32 %v1583, 1.442695
    %v1614 = vpow.pop %v1613
    %v1615 = vmul.f32 %v1584, 1.442695
    %v1616 = vpow.pop %v1615
    %v1617 = vmul.f32 %v1585, 1.442695
    %v1618 = vpow.pop %v1617
    %v1619 = vadd.f32 %v1588, %v1590
    %v1620 = vadd.f32 %v1619, %v1592
    %v1621 = vadd.f32 %v1620, %v1594
    %v1622 = vadd.f32 %v1621, %v1596
    %v1623 = vadd.f32 %v1622, %v1598
    %v1624 = vadd.f32 %v1623, %v1600
    %v1625 = vadd.f32 %v1624, %v1602
    %v1626 = vadd.f32 %v1625, %v1604
    %v1627 = vadd.f32 %v1626, %v1606
    %v1628 = vadd.f32 %v1627, %v1608
    %v1629 = vadd.f32 %v1628, %v1610
    %v1630 = vadd.f32 %v1629, %v1612
    %v1631 = vadd.f32 %v1630, %v1614
    %v1632 = vadd.f32 %v1631, %v1616
    %v1633 = vadd.f32 %v1632, %v1618
    %v1634 = vrot.slane %v1633, 4
    %v1635 = vadd.f32 %v1633, %v1634
    %v1636 = vrot.slane %v1635, 2
    %v1637 = vadd.f32 %v1635, %v1636
    %v1638 = vrot.slane %v1637, 1
    %v1639 = vadd.f32 %v1637, %v1638
    %v1640 = vadd.f32 %v1586, %v1639
    %1641 = vst [vmem:[#allocation2] sm:$0x1] %v1640
    // Predicated region
    $region26: #{tpu_custom_call.1} parent=1 // pred_check
      %p1642 = pneg %p32
    $region27: #{tpu_custom_call.1} parent=1 // pred_check_branch
      %1644 = sbr.rel (%p1642) target = $region29
    $region28: #{tpu_custom_call.1} parent=1 // pred_region
      %v1645 = vld [vmem:[#allocation2] sm:$0x1]
      %v1646 = vlog2.pop %v1645
      %v1647 = vmul.f32 %v1646, 0.6931472
      %1648 = vst [vmem:[#allocation7] sm:$0x1] %v1647
    $region29: #{tpu_custom_call.1} parent=1 // pred_fallthru
      _
    // Predicated region
    $region30: #{tpu_custom_call.1} parent=1 // pred_check
      _
    $region31: #{tpu_custom_call.1} parent=1 // pred_check_branch
      %1650 = sbr.rel (0) target = $region33
    $region32: #{tpu_custom_call.1} parent=1 // pred_region
      %s1652 = ssub.s32 16, 16
      %1653 = vsyncadd [#allocation6], %s1652
      %s1655 = sshll.u32 [#allocation7], 4
      %s1656 = int_to_ptr.vmem [resolvable:$true] %s1655
      %1658 = dma.vmem_to_hbm [thread:$0]  %s1656, 16, %s4, [#allocation6]
    $region33: #{tpu_custom_call.1} parent=1 // pred_fallthru
      _
    // Predicated region
    $region34: #{tpu_custom_call.1} parent=1 // pred_check
      _
    $region35: #{tpu_custom_call.1} parent=1 // pred_check_branch
      %1660 = sbr.rel (0) target = $region37
    $region36: #{tpu_custom_call.1} parent=1 // pred_region
      %1661 = dma.done [#allocation6], 16
    $region37: #{tpu_custom_call.1} parent=1 // pred_fallthru
      _
    %1662 = vsyncpa [#allocation5], 1
    %1663 = vsyncpa [#allocation6], 1

</llo_original>
